<compile_context>
chip_gen: v7x
topology: tpu7x:2x2x1
jax: 0.10.0
libtpu: 0.0.40
codegen_flags: <defaults>
</compile_context>

<pallas_src>
import jax
import jax.numpy as jnp
from jax.experimental import pallas as pl
from jax.experimental.pallas import tpu as pltpu


def pixel_attn_kernel(x_ref, w_all_ref, b_all_ref, gamma_ref,
                      out_ref, attn_ref,
                      q_scr, k_scr, v_scr):
    qi = pl.program_id(1)
    TQ = attn_ref.shape[1]
    C = out_ref.shape[2]
    C8 = q_scr.shape[1]

    # ---- once per batch: fused 1x1-conv projections into persistent VMEM scratch ----
    @pl.when(qi == 0)
    def _():
        x_all = x_ref[0]                                                     # (N, C)
        # single MXU pass over the concatenated weights [Wv | Wq | Wk]
        qkv = jnp.dot(x_all, w_all_ref[...],
                      preferred_element_type=jnp.float32) + b_all_ref[...]   # (N, C+2*C8)
        v_scr[...] = qkv[:, :C]                                              # (N, C)
        q_scr[...] = qkv[:, C:C + C8]                                        # (N, C8)
        k_scr[...] = qkv[:, C + C8:]                                         # (N, C8)

    # ---- per query tile ----
    row0 = pl.multiple_of(qi * TQ, TQ)
    q_tile = q_scr[pl.ds(row0, TQ), :]                                       # (TQ, C8)

    # energy[i, j] = <q_i, k_j>
    energy = jnp.dot(q_tile, k_scr[...].T,
                     preferred_element_type=jnp.float32)                     # (TQ, N)

    # numerically stable row softmax; exact per-row reciprocal instead of (TQ,N) divide
    m = jnp.max(energy, axis=-1, keepdims=True)
    e = jnp.exp(energy - m)
    inv = pl.reciprocal(jnp.sum(e, axis=-1, keepdims=True), approx=False)    # (TQ, 1)
    attn = e * inv
    attn_ref[0] = attn                                                       # lane-dense store

    # out[i, c] = sum_j attn[i, j] * v[j, c] ; gamma residual with the matching x rows
    o = jnp.dot(attn, v_scr[...], preferred_element_type=jnp.float32)        # (TQ, C)
    x_tile = x_ref[0, pl.ds(row0, TQ), :]                                    # (TQ, C)
    out_ref[0] = gamma_ref[0] * o + x_tile


def _vmem_estimate_bytes(tq, n, c, c8):
    c_all = c + 2 * c8
    return 4 * (
        2 * tq * n            # attention output block, double-buffered
        + 3 * tq * n          # energy / exp / attn value temporaries (slack)
        + 2 * tq * c          # out block, double-buffered
        + 2 * n * c           # x block, double-buffered
        + n * (c_all + 256)   # q/k/v scratch (+ lane-padding slack for narrow C8)
        + 2 * c_all * (c + 1) # fused weights + bias, double-buffered
    )


def _choose_tq(n, c, c8, vmem_budget_bytes=40 * 1024 * 1024):
    """Largest multiple of 8 dividing N whose working set fits the VMEM budget."""
    best = 8
    for t in range(8, n + 1, 8):
        if n % t == 0 and _vmem_estimate_bytes(t, n, c, c8) <= vmem_budget_bytes:
            best = t
    return best


def pixel_attn_forward(x_nchw, params, tq=None):
    """x_nchw: (B, C, W, H) float32. Returns (out (B,C,W,H), attention (B,N,N))."""
    wq, bq = params["wq"], params["bq"]
    wk, bk = params["wk"], params["bk"]
    wv, bv = params["wv"], params["bv"]
    gamma = params["gamma"]

    B, C, W, H = x_nchw.shape
    C8 = wq.shape[0]          # C // 8
    N = W * H
    assert N % 128 == 0 and C % 8 == 0, "pad spatial/channel dims for TPU tiling"

    TQ = _choose_tq(N, C, C8) if tq is None else tq
    assert N % TQ == 0 and TQ % 8 == 0, (N, TQ)

    # NCHW -> (B, N, C): pixel rows on sublanes, channels on lanes inside the kernel.
    x_nc = jnp.transpose(x_nchw.reshape(B, C, N), (0, 2, 1))

    # Fused projection operand: [Wv^T | Wq^T | Wk^T]  (wide v segment starts at lane 0).
    C_all = C + 2 * C8
    w_all = jnp.concatenate([jnp.transpose(wv), jnp.transpose(wq), jnp.transpose(wk)],
                            axis=1)                                  # (C, C_all)
    b_all = jnp.concatenate([bv, bq, bk]).reshape(1, C_all)
    gamma_r = gamma.reshape(1).astype(jnp.float32)

    # Advisory cost estimate: bandwidth-bound on the (B, N, N) attention write.
    flops = int(B * (2 * N * C * C_all + 2 * N * N * (C8 + C) + 3 * N * C))
    bytes_accessed = int(4 * (2 * B * N * C + B * N * N + C * C_all + C_all + 1))

    vmem_limit = int(min(48 * 1024 * 1024,
                         max(32 * 1024 * 1024, 2 * _vmem_estimate_bytes(TQ, N, C, C8))))

    out_nc, attn = pl.pallas_call(
        pixel_attn_kernel,
        out_shape=(
            jax.ShapeDtypeStruct((B, N, C), jnp.float32),
            jax.ShapeDtypeStruct((B, N, N), jnp.float32),
        ),
        grid_spec=pltpu.PrefetchScalarGridSpec(
            num_scalar_prefetch=0,
            grid=(B, N // TQ),
            in_specs=[
                pl.BlockSpec((1, N, C), lambda b, q: (b, 0, 0)),       # x (fetched once per batch)
                pl.BlockSpec((C, C_all), lambda b, q: (0, 0)),         # [Wv|Wq|Wk]^T
                pl.BlockSpec((1, C_all), lambda b, q: (0, 0)),         # [bv|bq|bk]
                pl.BlockSpec(memory_space=pltpu.MemorySpace.SMEM),     # gamma scalar
            ],
            out_specs=(
                pl.BlockSpec((1, TQ, C), lambda b, q: (b, q, 0)),      # out (NC layout)
                pl.BlockSpec((1, TQ, N), lambda b, q: (b, q, 0)),      # attention (lane-dense)
            ),
            scratch_shapes=[
                pltpu.VMEM((N, C8), jnp.float32),   # q  (all rows, reused across tiles)
                pltpu.VMEM((N, C8), jnp.float32),   # k
                pltpu.VMEM((N, C), jnp.float32),    # v
            ],
        ),
        compiler_params=pltpu.CompilerParams(
            dimension_semantics=("parallel", "arbitrary"),
            vmem_limit_bytes=vmem_limit,
        ),
        cost_estimate=pl.CostEstimate(
            flops=flops, transcendentals=B * N * N,
            bytes_accessed=bytes_accessed),
    )(x_nc, w_all, b_all, gamma_r)

    # (B, N, C) -> (B, C, N) -> (B, C, W, H): cheap wrapper-side layout plumbing.
    out = jnp.transpose(out_nc, (0, 2, 1)).reshape(B, C, W, H)
    return out, attn


def _reference_forward(x_nchw, params):
    """Pure-JAX reference mirroring the PyTorch module exactly."""
    wq, bq = params["wq"], params["bq"]
    wk, bk = params["wk"], params["bk"]
    wv, bv = params["wv"], params["bv"]
    gamma = params["gamma"]
    B, C, W, H = x_nchw.shape
    N = W * H
    xf = x_nchw.reshape(B, C, N)
    q = jnp.einsum("oc,bcn->bon", wq, xf) + bq[None, :, None]       # (B, C8, N)
    k = jnp.einsum("oc,bcn->bon", wk, xf) + bk[None, :, None]       # (B, C8, N)
    v = jnp.einsum("oc,bcn->bon", wv, xf) + bv[None, :, None]       # (B, C, N)
    energy = jnp.einsum("bci,bcj->bij", q, k)                        # (B, N, N)
    attn = jax.nn.softmax(energy, axis=-1)
    out = jnp.einsum("bcj,bij->bci", v, attn)                        # (B, C, N)
    out = gamma[0] * out + xf
    return out.reshape(B, C, W, H), attn


def init_params(key, in_dim):
    """Deterministic synthetic parameters matching the module's shapes."""
    c8 = in_dim // 8
    kq, kk, kv, kbq, kbk, kbv = jax.random.split(key, 6)
    s = 1.0 / float(in_dim) ** 0.5
    wq = jax.random.normal(kq, (c8, in_dim), jnp.float32) * s       # Conv2d (out, in, 1, 1) -> (out, in)
    wk = jax.random.normal(kk, (c8, in_dim), jnp.float32) * s
    wv = jax.random.normal(kv, (in_dim, in_dim), jnp.float32) * s
    bq = jax.random.normal(kbq, (c8,), jnp.float32) * 0.1
    bk = jax.random.normal(kbk, (c8,), jnp.float32) * 0.1
    bv = jax.random.normal(kbv, (in_dim,), jnp.float32) * 0.1
    # Module initializes gamma = 0; use a non-zero value here so the attention
    # branch actually contributes to `out` in this test (same value in reference).
    gamma = jnp.full((1,), 0.75, jnp.float32)
    return dict(wq=wq, bq=bq, wk=wk, bk=bk, wv=wv, bv=bv, gamma=gamma)


if __name__ == "__main__":
    key = jax.random.PRNGKey(0)
    kx, kp = jax.random.split(key)

    B, C, W, H = 2, 32, 16, 16           # in_dim must be >= 8 (C//8 q/k channels)
    x = jax.random.normal(kx, (B, C, W, H), jnp.float32)
    params = init_params(kp, C)

    # tq=128 -> two query tiles per batch, exercising the persistent-scratch path.
    out, attn = pixel_attn_forward(x, params, tq=128)
    out, attn = jax.block_until_ready((out, attn))

    ref_out, ref_attn = _reference_forward(x, params)
    N = W * H
    assert out.shape == (B, C, W, H), out.shape
    assert attn.shape == (B, N, N), attn.shape
    assert jnp.allclose(jnp.sum(attn, axis=-1), 1.0, atol=1e-5)
    assert jnp.allclose(attn, ref_attn, rtol=1e-4, atol=1e-5), (
        float(jnp.max(jnp.abs(attn - ref_attn))))
    assert jnp.allclose(out, ref_out, rtol=1e-4, atol=1e-4), (
        float(jnp.max(jnp.abs(out - ref_out))))

    print("KERNEL_OK")
</pallas_src>

<mosaic_0001>
module attributes {stable_mosaic.version = 11 : i64} {
  func.func @pixel_attn_kernel(%arg0: i32, %arg1: i32, %arg2: memref<1x256x32xf32, #tpu.memory_space<vmem>>, %arg3: memref<32x40xf32, #tpu.memory_space<vmem>>, %arg4: memref<1x40xf32, #tpu.memory_space<vmem>>, %arg5: memref<1xf32, #tpu.memory_space<smem>>, %arg6: memref<1x128x32xf32, #tpu.memory_space<vmem>>, %arg7: memref<1x128x256xf32, #tpu.memory_space<vmem>>, %arg8: memref<256x4xf32, #tpu.memory_space<vmem>>, %arg9: memref<256x4xf32, #tpu.memory_space<vmem>>, %arg10: memref<256x32xf32, #tpu.memory_space<vmem>>) attributes {dimension_semantics = [#tpu.dimension_semantics<parallel>, #tpu.dimension_semantics<arbitrary>], iteration_bounds = array<i64: 2, 2>, scalar_prefetch = 0 : i64, scratch_operands = 3 : i64, tpu.core_type = #tpu.core_type<tc>, window_params = [{transform_indices = @transform_0, window_bounds = array<i64: 1, 256, 32>}, {pipeline_mode = #tpu.pipeline_mode<synchronous>, transform_indices = @transform_1, window_bounds = array<i64: 32, 40>}, {pipeline_mode = #tpu.pipeline_mode<synchronous>, transform_indices = @transform_2, window_bounds = array<i64: 1, 40>}, {transform_indices = @transform_3, window_bounds = array<i64: 1>}, {transform_indices = @transform_4, window_bounds = array<i64: 1, 128, 32>}, {transform_indices = @transform_5, window_bounds = array<i64: 1, 128, 256>}]} {
    %c0_i32 = arith.constant 0 : i32
    %0 = arith.cmpi eq, %arg1, %c0_i32 : i32
    %1 = arith.extui %0 : i1 to i32
    %c0_i32_0 = arith.constant 0 : i32
    %2 = arith.cmpi ne, %1, %c0_i32_0 : i32
    scf.if %2 {
      %c0_17 = arith.constant 0 : index
      %c0_18 = arith.constant 0 : index
      %c0_19 = arith.constant 0 : index
      %35 = vector.load %arg2[%c0_17, %c0_18, %c0_19] : memref<1x256x32xf32, #tpu.memory_space<vmem>>, vector<1x256x32xf32>
      %36 = vector.shape_cast %35 : vector<1x256x32xf32> to vector<256x32xf32>
      %c0_20 = arith.constant 0 : index
      %c0_21 = arith.constant 0 : index
      %37 = vector.load %arg3[%c0_20, %c0_21] : memref<32x40xf32, #tpu.memory_space<vmem>>, vector<32x40xf32>
      %cst_22 = arith.constant dense<0.000000e+00> : vector<256x40xf32>
      %38 = tpu.matmul %36, %37, %cst_22 {dimension_numbers = #tpu.dot_dimension_numbers<[1], [0], [0], [1], [0, 0, 1, 1], [], []>} : vector<256x32xf32>, vector<32x40xf32>, vector<256x40xf32> -> vector<256x40xf32>
      %c0_23 = arith.constant 0 : index
      %c0_24 = arith.constant 0 : index
      %39 = vector.load %arg4[%c0_23, %c0_24] : memref<1x40xf32, #tpu.memory_space<vmem>>, vector<1x40xf32>
      %40 = vector.broadcast %39 : vector<1x40xf32> to vector<256x40xf32>
      %41 = arith.addf %38, %40 : vector<256x40xf32>
      %42 = vector.extract_strided_slice %41 {offsets = [0, 0], sizes = [256, 32], strides = [1, 1]} : vector<256x40xf32> to vector<256x32xf32>
      %c0_25 = arith.constant 0 : index
      %c0_26 = arith.constant 0 : index
      %43 = vector.load %arg10[%c0_25, %c0_26] : memref<256x32xf32, #tpu.memory_space<vmem>>, vector<256x32xf32>
      tpu.vector_store %arg10[%c0_25, %c0_26], %42 {strides = array<i32>} : memref<256x32xf32, #tpu.memory_space<vmem>>, vector<256x32xf32>,
      %44 = vector.extract_strided_slice %41 {offsets = [0, 32], sizes = [256, 4], strides = [1, 1]} : vector<256x40xf32> to vector<256x4xf32>
      %c0_27 = arith.constant 0 : index
      %c0_28 = arith.constant 0 : index
      %45 = vector.load %arg8[%c0_27, %c0_28] : memref<256x4xf32, #tpu.memory_space<vmem>>, vector<256x4xf32>
      tpu.vector_store %arg8[%c0_27, %c0_28], %44 {strides = array<i32>} : memref<256x4xf32, #tpu.memory_space<vmem>>, vector<256x4xf32>,
      %46 = vector.extract_strided_slice %41 {offsets = [0, 36], sizes = [256, 4], strides = [1, 1]} : vector<256x40xf32> to vector<256x4xf32>
      %c0_29 = arith.constant 0 : index
      %c0_30 = arith.constant 0 : index
      %47 = vector.load %arg9[%c0_29, %c0_30] : memref<256x4xf32, #tpu.memory_space<vmem>>, vector<256x4xf32>
      tpu.vector_store %arg9[%c0_29, %c0_30], %46 {strides = array<i32>} : memref<256x4xf32, #tpu.memory_space<vmem>>, vector<256x4xf32>,
    } else {
    }
    %c128_i32 = arith.constant 128 : i32
    %3 = arith.muli %arg1, %c128_i32 : i32
    %4 = tpu.assume_multiple %3, 128 : i32
    %5 = arith.index_cast %4 : i32 to index
    %c0 = arith.constant 0 : index
    %6 = vector.load %arg8[%5, %c0] : memref<256x4xf32, #tpu.memory_space<vmem>>, vector<128x4xf32>
    %c0_1 = arith.constant 0 : index
    %c0_2 = arith.constant 0 : index
    %7 = vector.load %arg9[%c0_1, %c0_2] : memref<256x4xf32, #tpu.memory_space<vmem>>, vector<256x4xf32>
    %8 = tpu.transpose %7, [1, 0] : vector<256x4xf32> -> vector<4x256xf32>
    %cst = arith.constant dense<0.000000e+00> : vector<128x256xf32>
    %9 = tpu.matmul %6, %8, %cst {dimension_numbers = #tpu.dot_dimension_numbers<[1], [0], [0], [1], [0, 0, 1, 1], [], []>} : vector<128x4xf32>, vector<4x256xf32>, vector<128x256xf32> -> vector<128x256xf32>
    %cst_3 = arith.constant dense<0xFF800000> : vector<128xf32>
    %10 = vector.multi_reduction <maximumf>, %9, %cst_3 [1] : vector<128x256xf32> to vector<128xf32>
    %11 = vector.shape_cast %10 : vector<128xf32> to vector<128x1xf32>
    %12 = vector.broadcast %11 : vector<128x1xf32> to vector<128x256xf32>
    %13 = arith.subf %9, %12 : vector<128x256xf32>
    %14 = math.exp %13 : vector<128x256xf32>
    %cst_4 = arith.constant dense<0.000000e+00> : vector<128xf32>
    %15 = vector.multi_reduction <add>, %14, %cst_4 [1] : vector<128x256xf32> to vector<128xf32>
    %16 = vector.shape_cast %15 : vector<128xf32> to vector<128x1xf32>
    %17 = tpu.reciprocal %16 : vector<128x1xf32> -> vector<128x1xf32>
    %18 = vector.broadcast %17 : vector<128x1xf32> to vector<128x256xf32>
    %19 = arith.mulf %14, %18 : vector<128x256xf32>
    %c0_5 = arith.constant 0 : index
    %c0_6 = arith.constant 0 : index
    %c0_7 = arith.constant 0 : index
    %20 = vector.load %arg7[%c0_5, %c0_6, %c0_7] : memref<1x128x256xf32, #tpu.memory_space<vmem>>, vector<1x128x256xf32>
    %21 = vector.shape_cast %20 : vector<1x128x256xf32> to vector<128x256xf32>
    %22 = vector.shape_cast %19 : vector<128x256xf32> to vector<1x128x256xf32>
    tpu.vector_store %arg7[%c0_5, %c0_6, %c0_7], %22 {strides = array<i32>} : memref<1x128x256xf32, #tpu.memory_space<vmem>>, vector<1x128x256xf32>,
    %c0_8 = arith.constant 0 : index
    %c0_9 = arith.constant 0 : index
    %23 = vector.load %arg10[%c0_8, %c0_9] : memref<256x32xf32, #tpu.memory_space<vmem>>, vector<256x32xf32>
    %cst_10 = arith.constant dense<0.000000e+00> : vector<128x32xf32>
    %24 = tpu.matmul %19, %23, %cst_10 {dimension_numbers = #tpu.dot_dimension_numbers<[1], [0], [0], [1], [0, 0, 1, 1], [], []>} : vector<128x256xf32>, vector<256x32xf32>, vector<128x32xf32> -> vector<128x32xf32>
    %c0_11 = arith.constant 0 : index
    %25 = arith.index_cast %4 : i32 to index
    %c0_12 = arith.constant 0 : index
    %26 = vector.load %arg2[%c0_11, %25, %c0_12] : memref<1x256x32xf32, #tpu.memory_space<vmem>>, vector<1x128x32xf32>
    %27 = vector.shape_cast %26 : vector<1x128x32xf32> to vector<128x32xf32>
    %c0_13 = arith.constant 0 : index
    %28 = memref.load %arg5[%c0_13] : memref<1xf32, #tpu.memory_space<smem>>
    %29 = vector.broadcast %28 : f32 to vector<128x32xf32>
    %30 = arith.mulf %29, %24 : vector<128x32xf32>
    %31 = arith.addf %30, %27 : vector<128x32xf32>
    %c0_14 = arith.constant 0 : index
    %c0_15 = arith.constant 0 : index
    %c0_16 = arith.constant 0 : index
    %32 = vector.load %arg6[%c0_14, %c0_15, %c0_16] : memref<1x128x32xf32, #tpu.memory_space<vmem>>, vector<1x128x32xf32>
    %33 = vector.shape_cast %32 : vector<1x128x32xf32> to vector<128x32xf32>
    %34 = vector.shape_cast %31 : vector<128x32xf32> to vector<1x128x32xf32>
    tpu.vector_store %arg6[%c0_14, %c0_15, %c0_16], %34 {strides = array<i32>} : memref<1x128x32xf32, #tpu.memory_space<vmem>>, vector<1x128x32xf32>,
    return
  }
  func.func @transform_0(%arg0: i32, %arg1: i32) -> (i32, i32, i32) {
    %c0_i32 = arith.constant 0 : i32
    %c0_i32_0 = arith.constant 0 : i32
    %c0_i32_1 = arith.constant 0 : i32
    return %arg0, %c0_i32, %c0_i32_0 : i32, i32, i32
  }
  func.func @transform_1(%arg0: i32, %arg1: i32) -> (i32, i32) {
    %c0_i32 = arith.constant 0 : i32
    %c0_i32_0 = arith.constant 0 : i32
    %c0_i32_1 = arith.constant 0 : i32
    return %c0_i32, %c0_i32_0 : i32, i32
  }
  func.func @transform_2(%arg0: i32, %arg1: i32) -> (i32, i32) {
    %c0_i32 = arith.constant 0 : i32
    %c0_i32_0 = arith.constant 0 : i32
    %c0_i32_1 = arith.constant 0 : i32
    return %c0_i32, %c0_i32_0 : i32, i32
  }
  func.func @transform_3(%arg0: i32, %arg1: i32) -> i32 {
    %c0_i32 = arith.constant 0 : i32
    %c0_i32_0 = arith.constant 0 : i32
    return %c0_i32 : i32
  }
  func.func @transform_4(%arg0: i32, %arg1: i32) -> (i32, i32, i32) {
    %c0_i32 = arith.constant 0 : i32
    %c0_i32_0 = arith.constant 0 : i32
    return %arg0, %arg1, %c0_i32 : i32, i32, i32
  }
  func.func @transform_5(%arg0: i32, %arg1: i32) -> (i32, i32, i32) {
    %c0_i32 = arith.constant 0 : i32
    %c0_i32_0 = arith.constant 0 : i32
    return %arg0, %arg1, %c0_i32 : i32, i32, i32
  }
}

</mosaic_0001>

<llo_original>
// kernel: tpu_custom_call.1
$region0: #{tpu_custom_call.1}
  #allocation0 [shape = 'u32[]', space=smem, size = 0x4, offset = 0x4, fixed_abs, tag = 'smem constant byte address 0x4 - core index']
  #allocation1 [shape = 'u32[144,128]{1,0:T(1,128)}', space=vmem, size = 0x12000, scoped, tag = 'internal scratch']
  #allocation2 [shape = 'f32[256,4]{1,0:T(8,128)}', space=vmem, size = 0x20000, scoped, tag = 'scratch operand']
  #allocation3 [shape = 'f32[256,4]{1,0:T(8,128)}', space=vmem, size = 0x20000, scoped, tag = 'scratch operand']
  #allocation4 [shape = 'f32[256,32]{1,0:T(8,128)}', space=vmem, size = 0x20000, scoped, tag = 'scratch operand']
  #allocation5 [shape = 'f32[1]{0:T(128)S(6)}', space=smem, size = 0x200, scoped, tag = 'scoped memory for tpu_custom_call.1']
  %s0 = inlined_call_operand.vmem [shape: f32[2,256,32], index: 0, kind: input, shape index: {}]
  %s1 = inlined_call_operand.vmem [shape: f32[32,40], index: 1, kind: input, shape index: {}]
  %s2 = inlined_call_operand.vmem [shape: f32[1,40], index: 2, kind: input, shape index: {}]
  %s3 = inlined_call_operand.<no memory space> [shape: f32[1], index: 3, kind: input, shape index: {}]
  %s4 = inlined_call_operand.vmem [shape: f32[2,256,32], index: 4, kind: output, shape index: {0}]
  %s5 = inlined_call_operand.hbm [shape: f32[2,256,256], index: 5, kind: output, shape index: {1}]
  %6 = xla_tuple %s4, %s5
  %s7 = sld [smem:[#allocation0]]
  $region61: #{tpu_custom_call.1} parent=0
    _
  %s9 = ssub.s32 1, %s7
  %s10 = scalar_select 0, %s9, %s7
  %11 = sst [smem:[#allocation5]] %s3
  $region1: #{tpu_custom_call.1} parent=0
    #allocation6 [shape = 'u8[262144]{0}', space=vmem, size = 0x40000, scoped, tag = 'output window, operand 1']
    #allocation7 [shape = 's32[2]{0}', space=sflag, size = 0x8, scoped, tag = 'scoped memory for tpu_custom_call.1']
    %12 = vsyncpa [#allocation7], 0
    %s13 = scalar_lea.sflag [#allocation7], 1
    %14 = vsyncpa %s13, 0
    loop: start=0, step=1, limit=6
    $region2: #{tpu_custom_call.1} parent=1 // loop_pre_header
      _
    $region3: #{tpu_custom_call.1} parent=1 // loop_header
      %s16 = sphi 0, %s20
      %p17 = scmp.ge.s32.totalorder %s16, 6
      %s23 = sphi 0, %s35
      %s24 = sphi 0, %s31
      %s25 = sphi 0, %s23
      %s26 = sphi 0, %s24
      %s27 = sphi 0, %s25
      %s28 = sphi 0, %s26
      %s38 = sphi 0, %s40
      %s41 = sphi 0, %s38
      %s42 = sphi 0, %s41
      %s58 = sphi 0, %s42
      %s62 = sphi 0, %s62
      %s64 = sphi 0, %s62
      %s65 = sphi 0, %s64
      %s79 = sphi 0, %s65
      %s83 = sphi 0, %s83
      %s85 = sphi 0, %s83
      %s86 = sphi 0, %s85
      %s100 = sphi 0, %s86
      %s104 = sphi 0, %s104
      %s106 = sphi 0, %s104
      %s107 = sphi 0, %s106
      %s121 = sphi 0, %s107
      %s129 = sphi 0, %s131
      %s132 = sphi 0, %s129
      %s133 = sphi 0, %s132
      %s149 = sphi 0, %s133
      %s157 = sphi 0, %s159
      %s160 = sphi 0, %s157
      %s161 = sphi 0, %s160
      %s177 = sphi 0, %s161
    $region4: #{tpu_custom_call.1} parent=1 // loop_header_branch
      %19 = sbr.rel (%p17) target = $region8
    $region5: #{tpu_custom_call.1} parent=1 // loop_body
      %s21 = ssub.s32 %s16, 1
      %s22 = ssub.s32 %s16, 2
      %s29 = sadd.s32 1, %s24
      %p30 = scmp.ge.s32.totalorder %s29, 2
      %s31 = scalar_select %p30, 0, %s29
      %s32 = sadd.s32 1, %s23
      %s33 = scalar_select %p30, %s32, %s23
      %p34 = scmp.ge.s32.totalorder %s33, 2
      %s35 = scalar_select %p34, 0, %s33
      %s36 = ssub.s32 %s23, %s35
      %p37 = scmp.eq.s32.totalorder %s36, 0
      %s39 = sadd.s32 %s38, 1
      %s40 = scalar_select %p37, %s38, %s39
      %p43 = pneg %p37
      %p44 = scmp.eq.s32.totalorder %s16, 3
      %p45 = por %p43, %p44
      %p46 = scmp.ne.s32.totalorder %s38, %s41
      %p47 = scmp.eq.s32.totalorder %s16, 0
      %p48 = por %p46, %p47
      %p49 = scmp.ne.s32.totalorder %s38, %s41
      %p50 = scmp.eq.s32.totalorder %s21, 3
      %p51 = por %p49, %p50
      %p52 = scmp.ne.s32.totalorder %s41, %s42
      %p53 = scmp.eq.s32.totalorder %s21, 0
      %p54 = por %p52, %p53
      %p55 = scmp.ne.s32.totalorder %s41, %s42
      %p56 = scmp.eq.s32.totalorder %s22, 3
      %p57 = por %p55, %p56
      %p59 = scmp.ne.s32.totalorder %s42, %s58
      %p60 = scmp.eq.s32.totalorder %s22, 0
      %p61 = por %p59, %p60
      %s63 = sadd.s32 %s62, 1
      %p66 = scmp.eq.s32.totalorder %s16, 3
      %p67 = scmp.ne.s32.totalorder %s62, %s64
      %p68 = scmp.eq.s32.totalorder %s16, 0
      %p69 = por %p67, %p68
      %p70 = scmp.ne.s32.totalorder %s62, %s64
      %p71 = scmp.eq.s32.totalorder %s21, 3
      %p72 = por %p70, %p71
      %p73 = scmp.ne.s32.totalorder %s64, %s65
      %p74 = scmp.eq.s32.totalorder %s21, 0
      %p75 = por %p73, %p74
      %p76 = scmp.ne.s32.totalorder %s64, %s65
      %p77 = scmp.eq.s32.totalorder %s22, 3
      %p78 = por %p76, %p77
      %p80 = scmp.ne.s32.totalorder %s65, %s79
      %p81 = scmp.eq.s32.totalorder %s22, 0
      %p82 = por %p80, %p81
      %s84 = sadd.s32 %s83, 1
      %p87 = scmp.eq.s32.totalorder %s16, 3
      %p88 = scmp.ne.s32.totalorder %s83, %s85
      %p89 = scmp.eq.s32.totalorder %s16, 0
      %p90 = por %p88, %p89
      %p91 = scmp.ne.s32.totalorder %s83, %s85
      %p92 = scmp.eq.s32.totalorder %s21, 3
      %p93 = por %p91, %p92
      %p94 = scmp.ne.s32.totalorder %s85, %s86
      %p95 = scmp.eq.s32.totalorder %s21, 0
      %p96 = por %p94, %p95
      %p97 = scmp.ne.s32.totalorder %s85, %s86
      %p98 = scmp.eq.s32.totalorder %s22, 3
      %p99 = por %p97, %p98
      %p101 = scmp.ne.s32.totalorder %s86, %s100
      %p102 = scmp.eq.s32.totalorder %s22, 0
      %p103 = por %p101, %p102
      %s105 = sadd.s32 %s104, 1
      %p108 = scmp.eq.s32.totalorder %s16, 3
      %p109 = scmp.ne.s32.totalorder %s104, %s106
      %p110 = scmp.eq.s32.totalorder %s16, 0
      %p111 = por %p109, %p110
      %p112 = scmp.ne.s32.totalorder %s104, %s106
      %p113 = scmp.eq.s32.totalorder %s21, 3
      %p114 = por %p112, %p113
      %p115 = scmp.ne.s32.totalorder %s106, %s107
      %p116 = scmp.eq.s32.totalorder %s21, 0
      %p117 = por %p115, %p116
      %p118 = scmp.ne.s32.totalorder %s106, %s107
      %p119 = scmp.eq.s32.totalorder %s22, 3
      %p120 = por %p118, %p119
      %p122 = scmp.ne.s32.totalorder %s107, %s121
      %p123 = scmp.eq.s32.totalorder %s22, 0
      %p124 = por %p122, %p123
      %s125 = ssub.s32 %s23, %s35
      %s126 = ssub.s32 %s24, %s31
      %s127 = sor.u32 %s125, %s126
      %p128 = scmp.eq.s32.totalorder %s127, 0
      %s130 = sadd.s32 %s129, 1
      %s131 = scalar_select %p128, %s129, %s130
      %p134 = pneg %p128
      %p135 = scmp.eq.s32.totalorder %s16, 3
      %p136 = por %p134, %p135
      %p137 = scmp.ne.s32.totalorder %s129, %s132
      %p138 = scmp.eq.s32.totalorder %s16, 0
      %p139 = por %p137, %p138
      %p140 = scmp.ne.s32.totalorder %s129, %s132
      %p141 = scmp.eq.s32.totalorder %s21, 3
      %p142 = por %p140, %p141
      %p143 = scmp.ne.s32.totalorder %s132, %s133
      %p144 = scmp.eq.s32.totalorder %s21, 0
      %p145 = por %p143, %p144
      %p146 = scmp.ne.s32.totalorder %s132, %s133
      %p147 = scmp.eq.s32.totalorder %s22, 3
      %p148 = por %p146, %p147
      %p150 = scmp.ne.s32.totalorder %s133, %s149
      %p151 = scmp.eq.s32.totalorder %s22, 0
      %p152 = por %p150, %p151
      %s153 = ssub.s32 %s23, %s35
      %s154 = ssub.s32 %s24, %s31
      %s155 = sor.u32 %s153, %s154
      %p156 = scmp.eq.s32.totalorder %s155, 0
      %s158 = sadd.s32 %s157, 1
      %s159 = scalar_select %p156, %s157, %s158
      %p162 = pneg %p156
      %p163 = scmp.eq.s32.totalorder %s16, 3
      %p164 = por %p162, %p163
      %p165 = scmp.ne.s32.totalorder %s157, %s160
      %p166 = scmp.eq.s32.totalorder %s16, 0
      %p167 = por %p165, %p166
      %p168 = scmp.ne.s32.totalorder %s157, %s160
      %p169 = scmp.eq.s32.totalorder %s21, 3
      %p170 = por %p168, %p169
      %p171 = scmp.ne.s32.totalorder %s160, %s161
      %p172 = scmp.eq.s32.totalorder %s21, 0
      %p173 = por %p171, %p172
      %p174 = scmp.ne.s32.totalorder %s160, %s161
      %p175 = scmp.eq.s32.totalorder %s22, 3
      %p176 = por %p174, %p175
      %p178 = scmp.ne.s32.totalorder %s161, %s177
      %p179 = scmp.eq.s32.totalorder %s22, 0
      %p180 = por %p178, %p179
      %p181 = scmp.le.s32.totalorder 1, %s16
      %p182 = scmp.lt.s32.totalorder %s16, 5
      %p183 = pnand %p181, %p182
      %p184 = pneg %p183
      // Predicated region
      $region9: #{tpu_custom_call.1} parent=5 // pred_check
        _
      $region10: #{tpu_custom_call.1} parent=5 // pred_check_branch
        %186 = sbr.rel (%p183) target = $region12
      $region11: #{tpu_custom_call.1} parent=5 // pred_region
        %s187 = ssub.s32 %s16, 1
        // Predicated region
        $region13: #{tpu_custom_call.1} parent=11 // pred_check
          %p188 = pneg %p75
        $region14: #{tpu_custom_call.1} parent=11 // pred_check_branch
          %190 = sbr.rel (%p188) target = $region16
        $region15: #{tpu_custom_call.1} parent=11 // pred_region
          _
        $region16: #{tpu_custom_call.1} parent=11 // pred_fallthru
          _
        // Predicated region
        $region17: #{tpu_custom_call.1} parent=11 // pred_check
          %p191 = pneg %p96
        $region18: #{tpu_custom_call.1} parent=11 // pred_check_branch
          %193 = sbr.rel (%p191) target = $region20
        $region19: #{tpu_custom_call.1} parent=11 // pred_region
          _
        $region20: #{tpu_custom_call.1} parent=11 // pred_fallthru
          _
        // Predicated region
        $region21: #{tpu_custom_call.1} parent=11 // pred_check
          %p194 = pneg %p117
        $region22: #{tpu_custom_call.1} parent=11 // pred_check_branch
          %196 = sbr.rel (%p194) target = $region24
        $region23: #{tpu_custom_call.1} parent=11 // pred_region
          _
        $region24: #{tpu_custom_call.1} parent=11 // pred_fallthru
          _
      $region12: #{tpu_custom_call.1} parent=5 // pred_fallthru
        _
      %p197 = scmp.lt.s32.totalorder %s16, 4
      // Predicated region
      $region25: #{tpu_custom_call.1} parent=5 // pred_check
        %p198 = pneg %p197
      $region26: #{tpu_custom_call.1} parent=5 // pred_check_branch
        %200 = sbr.rel (%p198) target = $region28
      $region27: #{tpu_custom_call.1} parent=5 // pred_region
        // Predicated region
        $region29: #{tpu_custom_call.1} parent=27 // pred_check
          %p201 = pneg %p48
        $region30: #{tpu_custom_call.1} parent=27 // pred_check_branch
          %203 = sbr.rel (%p201) target = $region32
        $region31: #{tpu_custom_call.1} parent=27 // pred_region
          %p204 = scmp.lt.s32.totalorder %s23, 1
          %s205 = scalar_select %p204, %s23, 1
          %s206 = smul.addr %s205, 32
          %s207 = smul.addr %s206, 8
          %s208 = scalar_lea.vmem %s0, %s207
        $region32: #{tpu_custom_call.1} parent=27 // pred_fallthru
          _
      $region28: #{tpu_custom_call.1} parent=5 // pred_fallthru
        _
      %p209 = scmp.le.s32.totalorder 1, %s16
      %p210 = scmp.lt.s32.totalorder %s16, 5
      %p211 = pnand %p209, %p210
      %p212 = pneg %p211
      // Predicated region
      $region33: #{tpu_custom_call.1} parent=5 // pred_check
        _
      $region34: #{tpu_custom_call.1} parent=5 // pred_check_branch
        %214 = sbr.rel (%p211) target = $region36
      $region35: #{tpu_custom_call.1} parent=5 // pred_region
        %s215 = ssub.s32 %s16, 1
        %p216 = scmp.lt.s32.totalorder %s25, 1
        %s217 = scalar_select %p216, %s25, 1
        %s218 = smul.addr %s217, 32
        %s219 = smul.addr %s218, 8
        %s220 = scalar_lea.vmem %s0, %s219
        %p221 = pneg %p54
        %p222 = pneg %p51
        %p223 = pneg %p75
        %p224 = pneg %p72
        %p225 = pneg %p96
        %p226 = pneg %p93
        %p227 = pneg %p117
        %p228 = pneg %p114
        %p229 = pneg %p145
        %p230 = pneg %p142
        %s231 = smul.u32 16, %s26
        %p232 = scmp.lt.s32.totalorder %s25, 1
        %s233 = scalar_select %p232, %s25, 1
        %p234 = scmp.lt.s32.totalorder %s231, 31
        %s235 = scalar_select %p234, %s231, 31
        %s236 = smul.addr %s233, 32
        %s237 = sadd.s32 %s235, %s236
        %s238 = smul.addr %s237, 8
        %s239 = scalar_lea.vmem %s4, %s238
        %p240 = pneg %p173
        %p241 = pneg %p170
        %s242 = sand.u32 %s160, 1
        %s243 = scalar_lea.sflag [#allocation7], %s242
        %s244 = sand.u32 %s160, 1
        %s245 = smul.addr %s244, 256
        %s246 = scalar_lea.vmem [#allocation6], %s245
        %p247 = scmp.lt.s32.totalorder %s25, 1
        %s248 = scalar_select %p247, %s25, 1
        %s249 = smul.addr %s248, 32
        %s250 = smul.addr %s249, 8
        %s251 = scalar_lea.vmem %s0, %s250
        %s252 = smul.u32 16, %s26
        %p253 = scmp.lt.s32.totalorder %s25, 1
        %s254 = scalar_select %p253, %s25, 1
        %p255 = scmp.lt.s32.totalorder %s252, 31
        %s256 = scalar_select %p255, %s252, 31
        %s257 = smul.addr %s254, 32
        %s258 = sadd.s32 %s256, %s257
        %s259 = smul.addr %s258, 8
        %s260 = scalar_lea.vmem %s4, %s259
        %s261 = smul.u32 16, %s26
        %s262 = smul.u32 16, %s26
        %p263 = scmp.eq.s32.totalorder %s26, 0
        // Predicated region
        $region37: #{tpu_custom_call.1} parent=35 // pred_check
          %p264 = pneg %p263
        $region38: #{tpu_custom_call.1} parent=35 // pred_check_branch
          %266 = sbr.rel (%p264) target = $region40
        $region39: #{tpu_custom_call.1} parent=35 // pred_region
          %v267 = vld [vmem:[%s251] sm:$0xff]
          %v268 = vld [vmem:[%s251 + $0x8] sm:$0xff]
          %v269 = vld [vmem:[%s251 + $0x10] sm:$0xff]
          %v270 = vld [vmem:[%s251 + $0x18] sm:$0xff]
          %v271 = vld [vmem:[%s251 + $0x20] sm:$0xff]
          %v272 = vld [vmem:[%s251 + $0x28] sm:$0xff]
          %v273 = vld [vmem:[%s251 + $0x30] sm:$0xff]
          %v274 = vld [vmem:[%s251 + $0x38] sm:$0xff]
          %v275 = vld [vmem:[%s251 + $0x40] sm:$0xff]
          %v276 = vld [vmem:[%s251 + $0x48] sm:$0xff]
          %v277 = vld [vmem:[%s251 + $0x50] sm:$0xff]
          %v278 = vld [vmem:[%s251 + $0x58] sm:$0xff]
          %v279 = vld [vmem:[%s251 + $0x60] sm:$0xff]
          %v280 = vld [vmem:[%s251 + $0x68] sm:$0xff]
          %v281 = vld [vmem:[%s251 + $0x70] sm:$0xff]
          %v282 = vld [vmem:[%s251 + $0x78] sm:$0xff]
          %v283 = vld [vmem:[%s251 + $0x80] sm:$0xff]
          %v284 = vld [vmem:[%s251 + $0x88] sm:$0xff]
          %v285 = vld [vmem:[%s251 + $0x90] sm:$0xff]
          %v286 = vld [vmem:[%s251 + $0x98] sm:$0xff]
          %v287 = vld [vmem:[%s251 + $0xa0] sm:$0xff]
          %v288 = vld [vmem:[%s251 + $0xa8] sm:$0xff]
          %v289 = vld [vmem:[%s251 + $0xb0] sm:$0xff]
          %v290 = vld [vmem:[%s251 + $0xb8] sm:$0xff]
          %v291 = vld [vmem:[%s251 + $0xc0] sm:$0xff]
          %v292 = vld [vmem:[%s251 + $0xc8] sm:$0xff]
          %v293 = vld [vmem:[%s251 + $0xd0] sm:$0xff]
          %v294 = vld [vmem:[%s251 + $0xd8] sm:$0xff]
          %v295 = vld [vmem:[%s251 + $0xe0] sm:$0xff]
          %v296 = vld [vmem:[%s251 + $0xe8] sm:$0xff]
          %v297 = vld [vmem:[%s251 + $0xf0] sm:$0xff]
          %v298 = vld [vmem:[%s251 + $0xf8] sm:$0xff]
          %v299 = vld [vmem:[%s1] sm:$0xff]
          %v300 = vld [vmem:[%s1 + $0x8] sm:$0xff]
          %v301 = vld [vmem:[%s1 + $0x10] sm:$0xff]
          %v302 = vld [vmem:[%s1 + $0x18] sm:$0xff]
          %v303 = vld [vmem:[%s2] sm:$0x1]
          %v305 = vlaneseq
          %v306 = vshrl.u32 %v305, 7
          %v307 = vsub.s32 0, %v306
          %v308 = vrot.slane %v303, %v307
          %vm310 = vcmask 261120
          %v312 = vsel %vm310, %v267, 0
          %v315 = vsel %vm310, %v268, 0
          %v318 = vsel %vm310, %v269, 0
          %v321 = vsel %vm310, %v270, 0
          %v324 = vsel %vm310, %v271, 0
          %v327 = vsel %vm310, %v272, 0
          %v330 = vsel %vm310, %v273, 0
          %v333 = vsel %vm310, %v274, 0
          %v336 = vsel %vm310, %v275, 0
          %v339 = vsel %vm310, %v276, 0
          %v342 = vsel %vm310, %v277, 0
          %v345 = vsel %vm310, %v278, 0
          %v348 = vsel %vm310, %v279, 0
          %v351 = vsel %vm310, %v280, 0
          %v354 = vsel %vm310, %v281, 0
          %v357 = vsel %vm310, %v282, 0
          %v360 = vsel %vm310, %v283, 0
          %v363 = vsel %vm310, %v284, 0
          %v366 = vsel %vm310, %v285, 0
          %v369 = vsel %vm310, %v286, 0
          %v372 = vsel %vm310, %v287, 0
          %v375 = vsel %vm310, %v288, 0
          %v378 = vsel %vm310, %v289, 0
          %v381 = vsel %vm310, %v290, 0
          %v384 = vsel %vm310, %v291, 0
          %v387 = vsel %vm310, %v292, 0
          %v390 = vsel %vm310, %v293, 0
          %v393 = vsel %vm310, %v294, 0
          %v396 = vsel %vm310, %v295, 0
          %v399 = vsel %vm310, %v296, 0
          %v402 = vsel %vm310, %v297, 0
          %v405 = vsel %vm310, %v298, 0
          %407 = vmatprep.subr.mxu0 0.0
          %408 = vmatpush1.msra.mxu0 %v299
          %409 = vmatprep.subr.mxu0 0.0
          %410 = vmatpush1.msra.mxu0 %v300
          %411 = vmatprep.subr.mxu0 0.0
          %412 = vmatpush1.msra.mxu0 %v301
          %413 = vmatprep.subr.mxu0 0.0
          %414 = vmatpush1.msra.mxu0 %v302
          %415 = vmatprep.subr.mxu0 0.0
          %416 = vmatpush1.msra.mxu0 0.0
          %417 = vmatprep.subr.mxu0 0.0
          %418 = vmatpush1.msra.mxu0 0.0
          %419 = vmatprep.subr.mxu0 0.0
          %420 = vmatpush1.msra.mxu0 0.0
          %421 = vmatprep.subr.mxu0 0.0
          %422 = vmatpush1.msra.mxu0 0.0
          %423 = vmatprep.subr.mxu0 0.0
          %424 = vmatpush1.msra.mxu0 0.0
          %425 = vmatprep.subr.mxu0 0.0
          %426 = vmatpush1.msra.mxu0 0.0
          %427 = vmatprep.subr.mxu0 0.0
          %428 = vmatpush1.msra.mxu0 0.0
          %429 = vmatprep.subr.mxu0 0.0
          %430 = vmatpush1.msra.mxu0 0.0
          %431 = vmatprep.subr.mxu0 0.0
          %432 = vmatpush1.msra.mxu0 0.0
          %433 = vmatprep.subr.mxu0 0.0
          %434 = vmatpush1.msra.mxu0 0.0
          %435 = vmatprep.subr.mxu0 0.0
          %436 = vmatpush1.msra.mxu0 0.0
          %437 = vmatprep.subr.mxu0 0.0
          %438 = vmatpush1.msra.mxu0 0.0
          %439 = vmatprep.subr.mxu0 0.0
          %440 = vmatpush1.msra.mxu0 0.0
          %441 = vmatprep.subr.mxu0 0.0
          %442 = vmatpush1.msra.mxu0 0.0
          %443 = vmatprep.subr.mxu0 0.0
          %444 = vmatpush1.msra.mxu0 0.0
          %445 = vmatprep.subr.mxu0 0.0
          %446 = vmatpush1.msra.mxu0 0.0
          %447 = vmatprep.subr.mxu0 0.0
          %448 = vmatpush1.msra.mxu0 0.0
          %449 = vmatprep.subr.mxu0 0.0
          %450 = vmatpush1.msra.mxu0 0.0
          %451 = vmatprep.subr.mxu0 0.0
          %452 = vmatpush1.msra.mxu0 0.0
          %453 = vmatprep.subr.mxu0 0.0
          %454 = vmatpush1.msra.mxu0 0.0
          %455 = vmatprep.subr.mxu0 0.0
          %456 = vmatpush1.msra.mxu0 0.0
          %457 = vmatprep.subr.mxu0 0.0
          %458 = vmatpush1.msra.mxu0 0.0
          %459 = vmatprep.subr.mxu0 0.0
          %460 = vmatpush1.msra.mxu0 0.0
          %461 = vmatprep.subr.mxu0 0.0
          %462 = vmatpush1.msra.mxu0 0.0
          %463 = vmatprep.subr.mxu0 0.0
          %464 = vmatpush1.msra.mxu0 0.0
          %465 = vmatprep.subr.mxu0 0.0
          %466 = vmatpush1.msra.mxu0 0.0
          %467 = vmatprep.subr.mxu0 0.0
          %468 = vmatpush1.msra.mxu0 0.0
          %469 = vmatprep.subr.mxu0 0.0
          %470 = vmatpush1.msra.mxu0 0.0
          %471 = vmatprep.mubr.f32.mxu0 0.0
          %472 = vmatmul.mubr.f32.gmra.mrb[0].mxu0 %v312
          %v473 = vpop.f32.mrb[0].mxu0
          %v474 = vadd.f32 %v308, %v473
          %v475 = vpop.f32.mrb[0].mxu0
          %476 = vmatprep.mubr.f32.mxu0 0.0
          %477 = vmatmul.mubr.f32.gmra.mrb[0].mxu0 %v315
          %v478 = vpop.f32.mrb[0].mxu0
          %v479 = vadd.f32 %v308, %v478
          %v480 = vpop.f32.mrb[0].mxu0
          %481 = vmatprep.mubr.f32.mxu0 0.0
          %482 = vmatmul.mubr.f32.gmra.mrb[0].mxu0 %v318
          %v483 = vpop.f32.mrb[0].mxu0
          %v484 = vadd.f32 %v308, %v483
          %v485 = vpop.f32.mrb[0].mxu0
          %486 = vmatprep.mubr.f32.mxu0 0.0
          %487 = vmatmul.mubr.f32.gmra.mrb[0].mxu0 %v321
          %v488 = vpop.f32.mrb[0].mxu0
          %v489 = vadd.f32 %v308, %v488
          %v490 = vpop.f32.mrb[0].mxu0
          %491 = vmatprep.mubr.f32.mxu0 0.0
          %492 = vmatmul.mubr.f32.gmra.mrb[0].mxu0 %v324
          %v493 = vpop.f32.mrb[0].mxu0
          %v494 = vadd.f32 %v308, %v493
          %v495 = vpop.f32.mrb[0].mxu0
          %496 = vmatprep.mubr.f32.mxu0 0.0
          %497 = vmatmul.mubr.f32.gmra.mrb[0].mxu0 %v327
          %v498 = vpop.f32.mrb[0].mxu0
          %v499 = vadd.f32 %v308, %v498
          %v500 = vpop.f32.mrb[0].mxu0
          %501 = vmatprep.mubr.f32.mxu0 0.0
          %502 = vmatmul.mubr.f32.gmra.mrb[0].mxu0 %v330
          %v503 = vpop.f32.mrb[0].mxu0
          %v504 = vadd.f32 %v308, %v503
          %v505 = vpop.f32.mrb[0].mxu0
          %506 = vmatprep.mubr.f32.mxu0 0.0
          %507 = vmatmul.mubr.f32.gmra.mrb[0].mxu0 %v333
          %v508 = vpop.f32.mrb[0].mxu0
          %v509 = vadd.f32 %v308, %v508
          %v510 = vpop.f32.mrb[0].mxu0
          %511 = vmatprep.mubr.f32.mxu0 0.0
          %512 = vmatmul.mubr.f32.gmra.mrb[0].mxu0 %v336
          %v513 = vpop.f32.mrb[0].mxu0
          %v514 = vadd.f32 %v308, %v513
          %v515 = vpop.f32.mrb[0].mxu0
          %516 = vmatprep.mubr.f32.mxu0 0.0
          %517 = vmatmul.mubr.f32.gmra.mrb[0].mxu0 %v339
          %v518 = vpop.f32.mrb[0].mxu0
          %v519 = vadd.f32 %v308, %v518
          %v520 = vpop.f32.mrb[0].mxu0
          %521 = vmatprep.mubr.f32.mxu0 0.0
          %522 = vmatmul.mubr.f32.gmra.mrb[0].mxu0 %v342
          %v523 = vpop.f32.mrb[0].mxu0
          %v524 = vadd.f32 %v308, %v523
          %v525 = vpop.f32.mrb[0].mxu0
          %526 = vmatprep.mubr.f32.mxu0 0.0
          %527 = vmatmul.mubr.f32.gmra.mrb[0].mxu0 %v345
          %v528 = vpop.f32.mrb[0].mxu0
          %v529 = vadd.f32 %v308, %v528
          %v530 = vpop.f32.mrb[0].mxu0
          %531 = vmatprep.mubr.f32.mxu0 0.0
          %532 = vmatmul.mubr.f32.gmra.mrb[0].mxu0 %v348
          %v533 = vpop.f32.mrb[0].mxu0
          %v534 = vadd.f32 %v308, %v533
          %v535 = vpop.f32.mrb[0].mxu0
          %536 = vmatprep.mubr.f32.mxu0 0.0
          %537 = vmatmul.mubr.f32.gmra.mrb[0].mxu0 %v351
          %v538 = vpop.f32.mrb[0].mxu0
          %v539 = vadd.f32 %v308, %v538
          %v540 = vpop.f32.mrb[0].mxu0
          %541 = vmatprep.mubr.f32.mxu0 0.0
          %542 = vmatmul.mubr.f32.gmra.mrb[0].mxu0 %v354
          %v543 = vpop.f32.mrb[0].mxu0
          %v544 = vadd.f32 %v308, %v543
          %v545 = vpop.f32.mrb[0].mxu0
          %546 = vmatprep.mubr.f32.mxu0 0.0
          %547 = vmatmul.mubr.f32.gmra.mrb[0].mxu0 %v357
          %v548 = vpop.f32.mrb[0].mxu0
          %v549 = vadd.f32 %v308, %v548
          %v550 = vpop.f32.mrb[0].mxu0
          %551 = vmatprep.mubr.f32.mxu0 0.0
          %552 = vmatmul.mubr.f32.gmra.mrb[0].mxu0 %v360
          %v553 = vpop.f32.mrb[0].mxu0
          %v554 = vadd.f32 %v308, %v553
          %v555 = vpop.f32.mrb[0].mxu0
          %556 = vmatprep.mubr.f32.mxu0 0.0
          %557 = vmatmul.mubr.f32.gmra.mrb[0].mxu0 %v363
          %v558 = vpop.f32.mrb[0].mxu0
          %v559 = vadd.f32 %v308, %v558
          %v560 = vpop.f32.mrb[0].mxu0
          %561 = vmatprep.mubr.f32.mxu0 0.0
          %562 = vmatmul.mubr.f32.gmra.mrb[0].mxu0 %v366
          %v563 = vpop.f32.mrb[0].mxu0
          %v564 = vadd.f32 %v308, %v563
          %v565 = vpop.f32.mrb[0].mxu0
          %566 = vmatprep.mubr.f32.mxu0 0.0
          %567 = vmatmul.mubr.f32.gmra.mrb[0].mxu0 %v369
          %v568 = vpop.f32.mrb[0].mxu0
          %v569 = vadd.f32 %v308, %v568
          %v570 = vpop.f32.mrb[0].mxu0
          %571 = vmatprep.mubr.f32.mxu0 0.0
          %572 = vmatmul.mubr.f32.gmra.mrb[0].mxu0 %v372
          %v573 = vpop.f32.mrb[0].mxu0
          %v574 = vadd.f32 %v308, %v573
          %v575 = vpop.f32.mrb[0].mxu0
          %576 = vmatprep.mubr.f32.mxu0 0.0
          %577 = vmatmul.mubr.f32.gmra.mrb[0].mxu0 %v375
          %v578 = vpop.f32.mrb[0].mxu0
          %v579 = vadd.f32 %v308, %v578
          %v580 = vpop.f32.mrb[0].mxu0
          %581 = vmatprep.mubr.f32.mxu0 0.0
          %582 = vmatmul.mubr.f32.gmra.mrb[0].mxu0 %v378
          %v583 = vpop.f32.mrb[0].mxu0
          %v584 = vadd.f32 %v308, %v583
          %v585 = vpop.f32.mrb[0].mxu0
          %586 = vmatprep.mubr.f32.mxu0 0.0
          %587 = vmatmul.mubr.f32.gmra.mrb[0].mxu0 %v381
          %v588 = vpop.f32.mrb[0].mxu0
          %v589 = vadd.f32 %v308, %v588
          %v590 = vpop.f32.mrb[0].mxu0
          %591 = vmatprep.mubr.f32.mxu0 0.0
          %592 = vmatmul.mubr.f32.gmra.mrb[0].mxu0 %v384
          %v593 = vpop.f32.mrb[0].mxu0
          %v594 = vadd.f32 %v308, %v593
          %v595 = vpop.f32.mrb[0].mxu0
          %596 = vmatprep.mubr.f32.mxu0 0.0
          %597 = vmatmul.mubr.f32.gmra.mrb[0].mxu0 %v387
          %v598 = vpop.f32.mrb[0].mxu0
          %v599 = vadd.f32 %v308, %v598
          %v600 = vpop.f32.mrb[0].mxu0
          %601 = vmatprep.mubr.f32.mxu0 0.0
          %602 = vmatmul.mubr.f32.gmra.mrb[0].mxu0 %v390
          %v603 = vpop.f32.mrb[0].mxu0
          %v604 = vadd.f32 %v308, %v603
          %v605 = vpop.f32.mrb[0].mxu0
          %606 = vmatprep.mubr.f32.mxu0 0.0
          %607 = vmatmul.mubr.f32.gmra.mrb[0].mxu0 %v393
          %v608 = vpop.f32.mrb[0].mxu0
          %v609 = vadd.f32 %v308, %v608
          %v610 = vpop.f32.mrb[0].mxu0
          %611 = vmatprep.mubr.f32.mxu0 0.0
          %612 = vmatmul.mubr.f32.gmra.mrb[0].mxu0 %v396
          %v613 = vpop.f32.mrb[0].mxu0
          %v614 = vadd.f32 %v308, %v613
          %v615 = vpop.f32.mrb[0].mxu0
          %616 = vmatprep.mubr.f32.mxu0 0.0
          %617 = vmatmul.mubr.f32.gmra.mrb[0].mxu0 %v399
          %v618 = vpop.f32.mrb[0].mxu0
          %v619 = vadd.f32 %v308, %v618
          %v620 = vpop.f32.mrb[0].mxu0
          %621 = vmatprep.mubr.f32.mxu0 0.0
          %622 = vmatmul.mubr.f32.gmra.mrb[0].mxu0 %v402
          %v623 = vpop.f32.mrb[0].mxu0
          %v624 = vadd.f32 %v308, %v623
          %v625 = vpop.f32.mrb[0].mxu0
          %626 = vmatprep.mubr.f32.mxu0 0.0
          %627 = vmatmul.mubr.f32.gmra.mrb[0].mxu0 %v405
          %v628 = vpop.f32.mrb[0].mxu0
          %v629 = vadd.f32 %v308, %v628
          %v630 = vpop.f32.mrb[0].mxu0
          %631 = vdwg.mxu0
          %632 = vst.msk [vmem:[#allocation4] sm:$0xff] %vm310, %v474
          %633 = vst.msk [vmem:[#allocation4 + $0x8] sm:$0xff] %vm310, %v479
          %634 = vst.msk [vmem:[#allocation4 + $0x10] sm:$0xff] %vm310, %v484
          %635 = vst.msk [vmem:[#allocation4 + $0x18] sm:$0xff] %vm310, %v489
          %636 = vst.msk [vmem:[#allocation4 + $0x20] sm:$0xff] %vm310, %v494
          %637 = vst.msk [vmem:[#allocation4 + $0x28] sm:$0xff] %vm310, %v499
          %638 = vst.msk [vmem:[#allocation4 + $0x30] sm:$0xff] %vm310, %v504
          %639 = vst.msk [vmem:[#allocation4 + $0x38] sm:$0xff] %vm310, %v509
          %640 = vst.msk [vmem:[#allocation4 + $0x40] sm:$0xff] %vm310, %v514
          %641 = vst.msk [vmem:[#allocation4 + $0x48] sm:$0xff] %vm310, %v519
          %642 = vst.msk [vmem:[#allocation4 + $0x50] sm:$0xff] %vm310, %v524
          %643 = vst.msk [vmem:[#allocation4 + $0x58] sm:$0xff] %vm310, %v529
          %644 = vst.msk [vmem:[#allocation4 + $0x60] sm:$0xff] %vm310, %v534
          %645 = vst.msk [vmem:[#allocation4 + $0x68] sm:$0xff] %vm310, %v539
          %646 = vst.msk [vmem:[#allocation4 + $0x70] sm:$0xff] %vm310, %v544
          %647 = vst.msk [vmem:[#allocation4 + $0x78] sm:$0xff] %vm310, %v549
          %648 = vst.msk [vmem:[#allocation4 + $0x80] sm:$0xff] %vm310, %v554
          %649 = vst.msk [vmem:[#allocation4 + $0x88] sm:$0xff] %vm310, %v559
          %650 = vst.msk [vmem:[#allocation4 + $0x90] sm:$0xff] %vm310, %v564
          %651 = vst.msk [vmem:[#allocation4 + $0x98] sm:$0xff] %vm310, %v569
          %652 = vst.msk [vmem:[#allocation4 + $0xa0] sm:$0xff] %vm310, %v574
          %653 = vst.msk [vmem:[#allocation4 + $0xa8] sm:$0xff] %vm310, %v579
          %654 = vst.msk [vmem:[#allocation4 + $0xb0] sm:$0xff] %vm310, %v584
          %655 = vst.msk [vmem:[#allocation4 + $0xb8] sm:$0xff] %vm310, %v589
          %656 = vst.msk [vmem:[#allocation4 + $0xc0] sm:$0xff] %vm310, %v594
          %657 = vst.msk [vmem:[#allocation4 + $0xc8] sm:$0xff] %vm310, %v599
          %658 = vst.msk [vmem:[#allocation4 + $0xd0] sm:$0xff] %vm310, %v604
          %659 = vst.msk [vmem:[#allocation4 + $0xd8] sm:$0xff] %vm310, %v609
          %660 = vst.msk [vmem:[#allocation4 + $0xe0] sm:$0xff] %vm310, %v614
          %661 = vst.msk [vmem:[#allocation4 + $0xe8] sm:$0xff] %vm310, %v619
          %662 = vst.msk [vmem:[#allocation4 + $0xf0] sm:$0xff] %vm310, %v624
          %663 = vst.msk [vmem:[#allocation4 + $0xf8] sm:$0xff] %vm310, %v629
          %696 = vrot.lane.b32.xlu0 %v474, 96
          %v697 = vpop.permute.xlu0 %696
          %698 = vrot.lane.b32.xlu0 %v479, 96
          %v699 = vpop.permute.xlu0 %698
          %700 = vrot.lane.b32.xlu0 %v484, 96
          %v701 = vpop.permute.xlu0 %700
          %702 = vrot.lane.b32.xlu0 %v489, 96
          %v703 = vpop.permute.xlu0 %702
          %704 = vrot.lane.b32.xlu0 %v494, 96
          %v705 = vpop.permute.xlu0 %704
          %706 = vrot.lane.b32.xlu0 %v499, 96
          %v707 = vpop.permute.xlu0 %706
          %708 = vrot.lane.b32.xlu0 %v504, 96
          %v709 = vpop.permute.xlu0 %708
          %710 = vrot.lane.b32.xlu0 %v509, 96
          %v711 = vpop.permute.xlu0 %710
          %712 = vrot.lane.b32.xlu0 %v514, 96
          %v713 = vpop.permute.xlu0 %712
          %714 = vrot.lane.b32.xlu0 %v519, 96
          %v715 = vpop.permute.xlu0 %714
          %716 = vrot.lane.b32.xlu0 %v524, 96
          %v717 = vpop.permute.xlu0 %716
          %718 = vrot.lane.b32.xlu0 %v529, 96
          %v719 = vpop.permute.xlu0 %718
          %720 = vrot.lane.b32.xlu0 %v534, 96
          %v721 = vpop.permute.xlu0 %720
          %722 = vrot.lane.b32.xlu0 %v539, 96
          %v723 = vpop.permute.xlu0 %722
          %724 = vrot.lane.b32.xlu0 %v544, 96
          %v725 = vpop.permute.xlu0 %724
          %726 = vrot.lane.b32.xlu0 %v549, 96
          %v727 = vpop.permute.xlu0 %726
          %728 = vrot.lane.b32.xlu0 %v554, 96
          %v729 = vpop.permute.xlu0 %728
          %730 = vrot.lane.b32.xlu0 %v559, 96
          %v731 = vpop.permute.xlu0 %730
          %732 = vrot.lane.b32.xlu0 %v564, 96
          %v733 = vpop.permute.xlu0 %732
          %734 = vrot.lane.b32.xlu0 %v569, 96
          %v735 = vpop.permute.xlu0 %734
          %736 = vrot.lane.b32.xlu0 %v574, 96
          %v737 = vpop.permute.xlu0 %736
          %738 = vrot.lane.b32.xlu0 %v579, 96
          %v739 = vpop.permute.xlu0 %738
          %740 = vrot.lane.b32.xlu0 %v584, 96
          %v741 = vpop.permute.xlu0 %740
          %742 = vrot.lane.b32.xlu0 %v589, 96
          %v743 = vpop.permute.xlu0 %742
          %744 = vrot.lane.b32.xlu0 %v594, 96
          %v745 = vpop.permute.xlu0 %744
          %746 = vrot.lane.b32.xlu0 %v599, 96
          %v747 = vpop.permute.xlu0 %746
          %748 = vrot.lane.b32.xlu0 %v604, 96
          %v749 = vpop.permute.xlu0 %748
          %750 = vrot.lane.b32.xlu0 %v609, 96
          %v751 = vpop.permute.xlu0 %750
          %752 = vrot.lane.b32.xlu0 %v614, 96
          %v753 = vpop.permute.xlu0 %752
          %754 = vrot.lane.b32.xlu0 %v619, 96
          %v755 = vpop.permute.xlu0 %754
          %756 = vrot.lane.b32.xlu0 %v624, 96
          %v757 = vpop.permute.xlu0 %756
          %758 = vrot.lane.b32.xlu0 %v629, 96
          %v759 = vpop.permute.xlu0 %758
          %vm792 = vcmask 31744
          %793 = vst.msk [vmem:[#allocation2] sm:$0xff] %vm792, %v697
          %794 = vst.msk [vmem:[#allocation2 + $0x8] sm:$0xff] %vm792, %v699
          %795 = vst.msk [vmem:[#allocation2 + $0x10] sm:$0xff] %vm792, %v701
          %796 = vst.msk [vmem:[#allocation2 + $0x18] sm:$0xff] %vm792, %v703
          %797 = vst.msk [vmem:[#allocation2 + $0x20] sm:$0xff] %vm792, %v705
          %798 = vst.msk [vmem:[#allocation2 + $0x28] sm:$0xff] %vm792, %v707
          %799 = vst.msk [vmem:[#allocation2 + $0x30] sm:$0xff] %vm792, %v709
          %800 = vst.msk [vmem:[#allocation2 + $0x38] sm:$0xff] %vm792, %v711
          %801 = vst.msk [vmem:[#allocation2 + $0x40] sm:$0xff] %vm792, %v713
          %802 = vst.msk [vmem:[#allocation2 + $0x48] sm:$0xff] %vm792, %v715
          %803 = vst.msk [vmem:[#allocation2 + $0x50] sm:$0xff] %vm792, %v717
          %804 = vst.msk [vmem:[#allocation2 + $0x58] sm:$0xff] %vm792, %v719
          %805 = vst.msk [vmem:[#allocation2 + $0x60] sm:$0xff] %vm792, %v721
          %806 = vst.msk [vmem:[#allocation2 + $0x68] sm:$0xff] %vm792, %v723
          %807 = vst.msk [vmem:[#allocation2 + $0x70] sm:$0xff] %vm792, %v725
          %808 = vst.msk [vmem:[#allocation2 + $0x78] sm:$0xff] %vm792, %v727
          %809 = vst.msk [vmem:[#allocation2 + $0x80] sm:$0xff] %vm792, %v729
          %810 = vst.msk [vmem:[#allocation2 + $0x88] sm:$0xff] %vm792, %v731
          %811 = vst.msk [vmem:[#allocation2 + $0x90] sm:$0xff] %vm792, %v733
          %812 = vst.msk [vmem:[#allocation2 + $0x98] sm:$0xff] %vm792, %v735
          %813 = vst.msk [vmem:[#allocation2 + $0xa0] sm:$0xff] %vm792, %v737
          %814 = vst.msk [vmem:[#allocation2 + $0xa8] sm:$0xff] %vm792, %v739
          %815 = vst.msk [vmem:[#allocation2 + $0xb0] sm:$0xff] %vm792, %v741
          %816 = vst.msk [vmem:[#allocation2 + $0xb8] sm:$0xff] %vm792, %v743
          %817 = vst.msk [vmem:[#allocation2 + $0xc0] sm:$0xff] %vm792, %v745
          %818 = vst.msk [vmem:[#allocation2 + $0xc8] sm:$0xff] %vm792, %v747
          %819 = vst.msk [vmem:[#allocation2 + $0xd0] sm:$0xff] %vm792, %v749
          %820 = vst.msk [vmem:[#allocation2 + $0xd8] sm:$0xff] %vm792, %v751
          %821 = vst.msk [vmem:[#allocation2 + $0xe0] sm:$0xff] %vm792, %v753
          %822 = vst.msk [vmem:[#allocation2 + $0xe8] sm:$0xff] %vm792, %v755
          %823 = vst.msk [vmem:[#allocation2 + $0xf0] sm:$0xff] %vm792, %v757
          %824 = vst.msk [vmem:[#allocation2 + $0xf8] sm:$0xff] %vm792, %v759
          %825 = vrot.lane.b32.xlu0 %v474, 92
          %v826 = vpop.permute.xlu0 %825
          %827 = vrot.lane.b32.xlu0 %v479, 92
          %v828 = vpop.permute.xlu0 %827
          %829 = vrot.lane.b32.xlu0 %v484, 92
          %v830 = vpop.permute.xlu0 %829
          %831 = vrot.lane.b32.xlu0 %v489, 92
          %v832 = vpop.permute.xlu0 %831
          %833 = vrot.lane.b32.xlu0 %v494, 92
          %v834 = vpop.permute.xlu0 %833
          %835 = vrot.lane.b32.xlu0 %v499, 92
          %v836 = vpop.permute.xlu0 %835
          %837 = vrot.lane.b32.xlu0 %v504, 92
          %v838 = vpop.permute.xlu0 %837
          %839 = vrot.lane.b32.xlu0 %v509, 92
          %v840 = vpop.permute.xlu0 %839
          %841 = vrot.lane.b32.xlu0 %v514, 92
          %v842 = vpop.permute.xlu0 %841
          %843 = vrot.lane.b32.xlu0 %v519, 92
          %v844 = vpop.permute.xlu0 %843
          %845 = vrot.lane.b32.xlu0 %v524, 92
          %v846 = vpop.permute.xlu0 %845
          %847 = vrot.lane.b32.xlu0 %v529, 92
          %v848 = vpop.permute.xlu0 %847
          %849 = vrot.lane.b32.xlu0 %v534, 92
          %v850 = vpop.permute.xlu0 %849
          %851 = vrot.lane.b32.xlu0 %v539, 92
          %v852 = vpop.permute.xlu0 %851
          %853 = vrot.lane.b32.xlu0 %v544, 92
          %v854 = vpop.permute.xlu0 %853
          %855 = vrot.lane.b32.xlu0 %v549, 92
          %v856 = vpop.permute.xlu0 %855
          %857 = vrot.lane.b32.xlu0 %v554, 92
          %v858 = vpop.permute.xlu0 %857
          %859 = vrot.lane.b32.xlu0 %v559, 92
          %v860 = vpop.permute.xlu0 %859
          %861 = vrot.lane.b32.xlu0 %v564, 92
          %v862 = vpop.permute.xlu0 %861
          %863 = vrot.lane.b32.xlu0 %v569, 92
          %v864 = vpop.permute.xlu0 %863
          %865 = vrot.lane.b32.xlu0 %v574, 92
          %v866 = vpop.permute.xlu0 %865
          %867 = vrot.lane.b32.xlu0 %v579, 92
          %v868 = vpop.permute.xlu0 %867
          %869 = vrot.lane.b32.xlu0 %v584, 92
          %v870 = vpop.permute.xlu0 %869
          %871 = vrot.lane.b32.xlu0 %v589, 92
          %v872 = vpop.permute.xlu0 %871
          %873 = vrot.lane.b32.xlu0 %v594, 92
          %v874 = vpop.permute.xlu0 %873
          %875 = vrot.lane.b32.xlu0 %v599, 92
          %v876 = vpop.permute.xlu0 %875
          %877 = vrot.lane.b32.xlu0 %v604, 92
          %v878 = vpop.permute.xlu0 %877
          %879 = vrot.lane.b32.xlu0 %v609, 92
          %v880 = vpop.permute.xlu0 %879
          %881 = vrot.lane.b32.xlu0 %v614, 92
          %v882 = vpop.permute.xlu0 %881
          %883 = vrot.lane.b32.xlu0 %v619, 92
          %v884 = vpop.permute.xlu0 %883
          %885 = vrot.lane.b32.xlu0 %v624, 92
          %v886 = vpop.permute.xlu0 %885
          %887 = vrot.lane.b32.xlu0 %v629, 92
          %v888 = vpop.permute.xlu0 %887
          %921 = vst.msk [vmem:[#allocation3] sm:$0xff] %vm792, %v826
          %922 = vst.msk [vmem:[#allocation3 + $0x8] sm:$0xff] %vm792, %v828
          %923 = vst.msk [vmem:[#allocation3 + $0x10] sm:$0xff] %vm792, %v830
          %924 = vst.msk [vmem:[#allocation3 + $0x18] sm:$0xff] %vm792, %v832
          %925 = vst.msk [vmem:[#allocation3 + $0x20] sm:$0xff] %vm792, %v834
          %926 = vst.msk [vmem:[#allocation3 + $0x28] sm:$0xff] %vm792, %v836
          %927 = vst.msk [vmem:[#allocation3 + $0x30] sm:$0xff] %vm792, %v838
          %928 = vst.msk [vmem:[#allocation3 + $0x38] sm:$0xff] %vm792, %v840
          %929 = vst.msk [vmem:[#allocation3 + $0x40] sm:$0xff] %vm792, %v842
          %930 = vst.msk [vmem:[#allocation3 + $0x48] sm:$0xff] %vm792, %v844
          %931 = vst.msk [vmem:[#allocation3 + $0x50] sm:$0xff] %vm792, %v846
          %932 = vst.msk [vmem:[#allocation3 + $0x58] sm:$0xff] %vm792, %v848
          %933 = vst.msk [vmem:[#allocation3 + $0x60] sm:$0xff] %vm792, %v850
          %934 = vst.msk [vmem:[#allocation3 + $0x68] sm:$0xff] %vm792, %v852
          %935 = vst.msk [vmem:[#allocation3 + $0x70] sm:$0xff] %vm792, %v854
          %936 = vst.msk [vmem:[#allocation3 + $0x78] sm:$0xff] %vm792, %v856
          %937 = vst.msk [vmem:[#allocation3 + $0x80] sm:$0xff] %vm792, %v858
          %938 = vst.msk [vmem:[#allocation3 + $0x88] sm:$0xff] %vm792, %v860
          %939 = vst.msk [vmem:[#allocation3 + $0x90] sm:$0xff] %vm792, %v862
          %940 = vst.msk [vmem:[#allocation3 + $0x98] sm:$0xff] %vm792, %v864
          %941 = vst.msk [vmem:[#allocation3 + $0xa0] sm:$0xff] %vm792, %v866
          %942 = vst.msk [vmem:[#allocation3 + $0xa8] sm:$0xff] %vm792, %v868
          %943 = vst.msk [vmem:[#allocation3 + $0xb0] sm:$0xff] %vm792, %v870
          %944 = vst.msk [vmem:[#allocation3 + $0xb8] sm:$0xff] %vm792, %v872
          %945 = vst.msk [vmem:[#allocation3 + $0xc0] sm:$0xff] %vm792, %v874
          %946 = vst.msk [vmem:[#allocation3 + $0xc8] sm:$0xff] %vm792, %v876
          %947 = vst.msk [vmem:[#allocation3 + $0xd0] sm:$0xff] %vm792, %v878
          %948 = vst.msk [vmem:[#allocation3 + $0xd8] sm:$0xff] %vm792, %v880
          %949 = vst.msk [vmem:[#allocation3 + $0xe0] sm:$0xff] %vm792, %v882
          %950 = vst.msk [vmem:[#allocation3 + $0xe8] sm:$0xff] %vm792, %v884
          %951 = vst.msk [vmem:[#allocation3 + $0xf0] sm:$0xff] %vm792, %v886
          %952 = vst.msk [vmem:[#allocation3 + $0xf8] sm:$0xff] %vm792, %v888
        $region40: #{tpu_custom_call.1} parent=35 // pred_fallthru
          _
        %s953 = smul.u32 %s26, 128
        %s954 = scalar_lea.vmem [#allocation2], %s953
        %v955 = vld [vmem:[%s954] sm:$0xff]
        %v956 = vld [vmem:[%s954 + $0x8] sm:$0xff]
        %v957 = vld [vmem:[%s954 + $0x10] sm:$0xff]
        %v958 = vld [vmem:[%s954 + $0x18] sm:$0xff]
        %v959 = vld [vmem:[%s954 + $0x20] sm:$0xff]
        %v960 = vld [vmem:[%s954 + $0x28] sm:$0xff]
        %v961 = vld [vmem:[%s954 + $0x30] sm:$0xff]
        %v962 = vld [vmem:[%s954 + $0x38] sm:$0xff]
        %v963 = vld [vmem:[%s954 + $0x40] sm:$0xff]
        %v964 = vld [vmem:[%s954 + $0x48] sm:$0xff]
        %v965 = vld [vmem:[%s954 + $0x50] sm:$0xff]
        %v966 = vld [vmem:[%s954 + $0x58] sm:$0xff]
        %v967 = vld [vmem:[%s954 + $0x60] sm:$0xff]
        %v968 = vld [vmem:[%s954 + $0x68] sm:$0xff]
        %v969 = vld [vmem:[%s954 + $0x70] sm:$0xff]
        %v970 = vld [vmem:[%s954 + $0x78] sm:$0xff]
        %v971 = vld [vmem:[#allocation3] sm:$0xff]
        %v972 = vld [vmem:[#allocation3 + $0x8] sm:$0xff]
        %v973 = vld [vmem:[#allocation3 + $0x10] sm:$0xff]
        %v974 = vld [vmem:[#allocation3 + $0x18] sm:$0xff]
        %v975 = vld [vmem:[#allocation3 + $0x20] sm:$0xff]
        %v976 = vld [vmem:[#allocation3 + $0x28] sm:$0xff]
        %v977 = vld [vmem:[#allocation3 + $0x30] sm:$0xff]
        %v978 = vld [vmem:[#allocation3 + $0x38] sm:$0xff]
        %v979 = vld [vmem:[#allocation3 + $0x40] sm:$0xff]
        %v980 = vld [vmem:[#allocation3 + $0x48] sm:$0xff]
        %v981 = vld [vmem:[#allocation3 + $0x50] sm:$0xff]
        %v982 = vld [vmem:[#allocation3 + $0x58] sm:$0xff]
        %v983 = vld [vmem:[#allocation3 + $0x60] sm:$0xff]
        %v984 = vld [vmem:[#allocation3 + $0x68] sm:$0xff]
        %v985 = vld [vmem:[#allocation3 + $0x70] sm:$0xff]
        %v986 = vld [vmem:[#allocation3 + $0x78] sm:$0xff]
        %v987 = vld [vmem:[#allocation3 + $0x80] sm:$0xff]
        %v988 = vld [vmem:[#allocation3 + $0x88] sm:$0xff]
        %v989 = vld [vmem:[#allocation3 + $0x90] sm:$0xff]
        %v990 = vld [vmem:[#allocation3 + $0x98] sm:$0xff]
        %v991 = vld [vmem:[#allocation3 + $0xa0] sm:$0xff]
        %v992 = vld [vmem:[#allocation3 + $0xa8] sm:$0xff]
        %v993 = vld [vmem:[#allocation3 + $0xb0] sm:$0xff]
        %v994 = vld [vmem:[#allocation3 + $0xb8] sm:$0xff]
        %v995 = vld [vmem:[#allocation3 + $0xc0] sm:$0xff]
        %v996 = vld [vmem:[#allocation3 + $0xc8] sm:$0xff]
        %v997 = vld [vmem:[#allocation3 + $0xd0] sm:$0xff]
        %v998 = vld [vmem:[#allocation3 + $0xd8] sm:$0xff]
        %v999 = vld [vmem:[#allocation3 + $0xe0] sm:$0xff]
        %v1000 = vld [vmem:[#allocation3 + $0xe8] sm:$0xff]
        %v1001 = vld [vmem:[#allocation3 + $0xf0] sm:$0xff]
        %v1002 = vld [vmem:[#allocation3 + $0xf8] sm:$0xff]
        %vm1003 = vcmask 31744
        %v1005 = vsel %vm1003, %v955, 0
        %v1008 = vsel %vm1003, %v956, 0
        %v1011 = vsel %vm1003, %v957, 0
        %v1014 = vsel %vm1003, %v958, 0
        %v1017 = vsel %vm1003, %v959, 0
        %v1020 = vsel %vm1003, %v960, 0
        %v1023 = vsel %vm1003, %v961, 0
        %v1026 = vsel %vm1003, %v962, 0
        %v1029 = vsel %vm1003, %v963, 0
        %v1032 = vsel %vm1003, %v964, 0
        %v1035 = vsel %vm1003, %v965, 0
        %v1038 = vsel %vm1003, %v966, 0
        %v1041 = vsel %vm1003, %v967, 0
        %v1044 = vsel %vm1003, %v968, 0
        %v1047 = vsel %vm1003, %v969, 0
        %v1050 = vsel %vm1003, %v970, 0
        %v1053 = vsel %vm1003, %v971, 0
        %v1056 = vsel %vm1003, %v972, 0
        %v1059 = vsel %vm1003, %v973, 0
        %v1062 = vsel %vm1003, %v974, 0
        %v1065 = vsel %vm1003, %v975, 0
        %v1068 = vsel %vm1003, %v976, 0
        %v1071 = vsel %vm1003, %v977, 0
        %v1074 = vsel %vm1003, %v978, 0
        %v1077 = vsel %vm1003, %v979, 0
        %v1080 = vsel %vm1003, %v980, 0
        %v1083 = vsel %vm1003, %v981, 0
        %v1086 = vsel %vm1003, %v982, 0
        %v1089 = vsel %vm1003, %v983, 0
        %v1092 = vsel %vm1003, %v984, 0
        %v1095 = vsel %vm1003, %v985, 0
        %v1098 = vsel %vm1003, %v986, 0
        %v1101 = vsel %vm1003, %v987, 0
        %v1104 = vsel %vm1003, %v988, 0
        %v1107 = vsel %vm1003, %v989, 0
        %v1110 = vsel %vm1003, %v990, 0
        %v1113 = vsel %vm1003, %v991, 0
        %v1116 = vsel %vm1003, %v992, 0
        %v1119 = vsel %vm1003, %v993, 0
        %v1122 = vsel %vm1003, %v994, 0
        %v1125 = vsel %vm1003, %v995, 0
        %v1128 = vsel %vm1003, %v996, 0
        %v1131 = vsel %vm1003, %v997, 0
        %v1134 = vsel %vm1003, %v998, 0
        %v1137 = vsel %vm1003, %v999, 0
        %v1140 = vsel %vm1003, %v1000, 0
        %v1143 = vsel %vm1003, %v1001, 0
        %v1146 = vsel %vm1003, %v1002, 0
        %1148 = vmatprep.subr.mxu0 0.0
        %1149 = vmatpush1.xpose.msra.mxu0 %v1053
        %1150 = vmatprep.subr.mxu0 0.0
        %1151 = vmatpush1.xpose.msra.mxu0 %v1056
        %1152 = vmatprep.subr.mxu0 0.0
        %1153 = vmatpush1.xpose.msra.mxu0 %v1059
        %1154 = vmatprep.subr.mxu0 0.0
        %1155 = vmatpush1.xpose.msra.mxu0 %v1062
        %1156 = vmatprep.subr.mxu0 0.0
        %1157 = vmatpush1.xpose.msra.mxu0 %v1065
        %1158 = vmatprep.subr.mxu0 0.0
        %1159 = vmatpush1.xpose.msra.mxu0 %v1068
        %1160 = vmatprep.subr.mxu0 0.0
        %1161 = vmatpush1.xpose.msra.mxu0 %v1071
        %1162 = vmatprep.subr.mxu0 0.0
        %1163 = vmatpush1.xpose.msra.mxu0 %v1074
        %1164 = vmatprep.subr.mxu0 0.0
        %1165 = vmatpush1.xpose.msra.mxu0 %v1077
        %1166 = vmatprep.subr.mxu0 0.0
        %1167 = vmatpush1.xpose.msra.mxu0 %v1080
        %1168 = vmatprep.subr.mxu0 0.0
        %1169 = vmatpush1.xpose.msra.mxu0 %v1083
        %1170 = vmatprep.subr.mxu0 0.0
        %1171 = vmatpush1.xpose.msra.mxu0 %v1086
        %1172 = vmatprep.subr.mxu0 0.0
        %1173 = vmatpush1.xpose.msra.mxu0 %v1089
        %1174 = vmatprep.subr.mxu0 0.0
        %1175 = vmatpush1.xpose.msra.mxu0 %v1092
        %1176 = vmatprep.subr.mxu0 0.0
        %1177 = vmatpush1.xpose.msra.mxu0 %v1095
        %1178 = vmatprep.subr.mxu0 0.0
        %1179 = vmatpush1.xpose.msra.mxu0 %v1098
        %1180 = vmatprep.subr.mxu0 0.0
        %1181 = vmatpush1.xpose.msra.mxu0 %v1101
        %1182 = vmatprep.subr.mxu0 0.0
        %1183 = vmatpush1.xpose.msra.mxu0 %v1104
        %1184 = vmatprep.subr.mxu0 0.0
        %1185 = vmatpush1.xpose.msra.mxu0 %v1107
        %1186 = vmatprep.subr.mxu0 0.0
        %1187 = vmatpush1.xpose.msra.mxu0 %v1110
        %1188 = vmatprep.subr.mxu0 0.0
        %1189 = vmatpush1.xpose.msra.mxu0 %v1113
        %1190 = vmatprep.subr.mxu0 0.0
        %1191 = vmatpush1.xpose.msra.mxu0 %v1116
        %1192 = vmatprep.subr.mxu0 0.0
        %1193 = vmatpush1.xpose.msra.mxu0 %v1119
        %1194 = vmatprep.subr.mxu0 0.0
        %1195 = vmatpush1.xpose.msra.mxu0 %v1122
        %1196 = vmatprep.subr.mxu0 0.0
        %1197 = vmatpush1.xpose.msra.mxu0 %v1125
        %1198 = vmatprep.subr.mxu0 0.0
        %1199 = vmatpush1.xpose.msra.mxu0 %v1128
        %1200 = vmatprep.subr.mxu0 0.0
        %1201 = vmatpush1.xpose.msra.mxu0 %v1131
        %1202 = vmatprep.subr.mxu0 0.0
        %1203 = vmatpush1.xpose.msra.mxu0 %v1134
        %1204 = vmatprep.subr.mxu0 0.0
        %1205 = vmatpush1.xpose.msra.mxu0 %v1137
        %1206 = vmatprep.subr.mxu0 0.0
        %1207 = vmatpush1.xpose.msra.mxu0 %v1140
        %1208 = vmatprep.subr.mxu0 0.0
        %1209 = vmatpush1.xpose.msra.mxu0 %v1143
        %1210 = vmatprep.subr.mxu0 0.0
        %1211 = vmatpush1.xpose.msra.mxu0 %v1146
        %1212 = vmatprep.mubr.f32.mxu0 0.0
        %1213 = vmatmul.mubr.f32.gmra.mrb[0].mxu0 %v1005
        %v1214 = vpop.f32.mrb[0].mxu0
        %v1215 = vadd.f32 0.0, %v1214
        %v1216 = vpop.f32.mrb[0].mxu0
        %v1217 = vadd.f32 0.0, %v1216
        %1218 = vmatprep.mubr.f32.mxu0 0.0
        %1219 = vmatmul.mubr.f32.gmra.mrb[0].mxu0 %v1008
        %v1220 = vpop.f32.mrb[0].mxu0
        %v1221 = vadd.f32 0.0, %v1220
        %v1222 = vpop.f32.mrb[0].mxu0
        %v1223 = vadd.f32 0.0, %v1222
        %1224 = vmatprep.mubr.f32.mxu0 0.0
        %1225 = vmatmul.mubr.f32.gmra.mrb[0].mxu0 %v1011
        %v1226 = vpop.f32.mrb[0].mxu0
        %v1227 = vadd.f32 0.0, %v1226
        %v1228 = vpop.f32.mrb[0].mxu0
        %v1229 = vadd.f32 0.0, %v1228
        %1230 = vmatprep.mubr.f32.mxu0 0.0
        %1231 = vmatmul.mubr.f32.gmra.mrb[0].mxu0 %v1014
        %v1232 = vpop.f32.mrb[0].mxu0
        %v1233 = vadd.f32 0.0, %v1232
        %v1234 = vpop.f32.mrb[0].mxu0
        %v1235 = vadd.f32 0.0, %v1234
        %1236 = vmatprep.mubr.f32.mxu0 0.0
        %1237 = vmatmul.mubr.f32.gmra.mrb[0].mxu0 %v1017
        %v1238 = vpop.f32.mrb[0].mxu0
        %v1239 = vadd.f32 0.0, %v1238
        %v1240 = vpop.f32.mrb[0].mxu0
        %v1241 = vadd.f32 0.0, %v1240
        %1242 = vmatprep.mubr.f32.mxu0 0.0
        %1243 = vmatmul.mubr.f32.gmra.mrb[0].mxu0 %v1020
        %v1244 = vpop.f32.mrb[0].mxu0
        %v1245 = vadd.f32 0.0, %v1244
        %v1246 = vpop.f32.mrb[0].mxu0
        %v1247 = vadd.f32 0.0, %v1246
        %1248 = vmatprep.mubr.f32.mxu0 0.0
        %1249 = vmatmul.mubr.f32.gmra.mrb[0].mxu0 %v1023
        %v1250 = vpop.f32.mrb[0].mxu0
        %v1251 = vadd.f32 0.0, %v1250
        %v1252 = vpop.f32.mrb[0].mxu0
        %v1253 = vadd.f32 0.0, %v1252
        %1254 = vmatprep.mubr.f32.mxu0 0.0
        %1255 = vmatmul.mubr.f32.gmra.mrb[0].mxu0 %v1026
        %v1256 = vpop.f32.mrb[0].mxu0
        %v1257 = vadd.f32 0.0, %v1256
        %v1258 = vpop.f32.mrb[0].mxu0
        %v1259 = vadd.f32 0.0, %v1258
        %1260 = vmatprep.mubr.f32.mxu0 0.0
        %1261 = vmatmul.mubr.f32.gmra.mrb[0].mxu0 %v1029
        %v1262 = vpop.f32.mrb[0].mxu0
        %v1263 = vadd.f32 0.0, %v1262
        %v1264 = vpop.f32.mrb[0].mxu0
        %v1265 = vadd.f32 0.0, %v1264
        %1266 = vmatprep.mubr.f32.mxu0 0.0
        %1267 = vmatmul.mubr.f32.gmra.mrb[0].mxu0 %v1032
        %v1268 = vpop.f32.mrb[0].mxu0
        %v1269 = vadd.f32 0.0, %v1268
        %v1270 = vpop.f32.mrb[0].mxu0
        %v1271 = vadd.f32 0.0, %v1270
        %1272 = vmatprep.mubr.f32.mxu0 0.0
        %1273 = vmatmul.mubr.f32.gmra.mrb[0].mxu0 %v1035
        %v1274 = vpop.f32.mrb[0].mxu0
        %v1275 = vadd.f32 0.0, %v1274
        %v1276 = vpop.f32.mrb[0].mxu0
        %v1277 = vadd.f32 0.0, %v1276
        %1278 = vmatprep.mubr.f32.mxu0 0.0
        %1279 = vmatmul.mubr.f32.gmra.mrb[0].mxu0 %v1038
        %v1280 = vpop.f32.mrb[0].mxu0
        %v1281 = vadd.f32 0.0, %v1280
        %v1282 = vpop.f32.mrb[0].mxu0
        %v1283 = vadd.f32 0.0, %v1282
        %1284 = vmatprep.mubr.f32.mxu0 0.0
        %1285 = vmatmul.mubr.f32.gmra.mrb[0].mxu0 %v1041
        %v1286 = vpop.f32.mrb[0].mxu0
        %v1287 = vadd.f32 0.0, %v1286
        %v1288 = vpop.f32.mrb[0].mxu0
        %v1289 = vadd.f32 0.0, %v1288
        %1290 = vmatprep.mubr.f32.mxu0 0.0
        %1291 = vmatmul.mubr.f32.gmra.mrb[0].mxu0 %v1044
        %v1292 = vpop.f32.mrb[0].mxu0
        %v1293 = vadd.f32 0.0, %v1292
        %v1294 = vpop.f32.mrb[0].mxu0
        %v1295 = vadd.f32 0.0, %v1294
        %1296 = vmatprep.mubr.f32.mxu0 0.0
        %1297 = vmatmul.mubr.f32.gmra.mrb[0].mxu0 %v1047
        %v1298 = vpop.f32.mrb[0].mxu0
        %v1299 = vadd.f32 0.0, %v1298
        %v1300 = vpop.f32.mrb[0].mxu0
        %v1301 = vadd.f32 0.0, %v1300
        %1302 = vmatprep.mubr.f32.mxu0 0.0
        %1303 = vmatmul.mubr.f32.gmra.mrb[0].mxu0 %v1050
        %v1304 = vpop.f32.mrb[0].mxu0
        %v1305 = vadd.f32 0.0, %v1304
        %v1306 = vpop.f32.mrb[0].mxu0
        %v1307 = vadd.f32 0.0, %v1306
        %1308 = vdwg.mxu0
        %v1309 = vmax.f32 %v1215, %v1217
        %1310 = vmax.xlane.f32.xlu0 %v1309
        %v1311 = vpop.xlane.xlu0 %1310
        %v1312 = vmax.f32 %v1221, %v1223
        %1313 = vmax.xlane.f32.xlu0 %v1312
        %v1314 = vpop.xlane.xlu0 %1313
        %v1315 = vmax.f32 %v1227, %v1229
        %1316 = vmax.xlane.f32.xlu0 %v1315
        %v1317 = vpop.xlane.xlu0 %1316
        %v1318 = vmax.f32 %v1233, %v1235
        %1319 = vmax.xlane.f32.xlu0 %v1318
        %v1320 = vpop.xlane.xlu0 %1319
        %v1321 = vmax.f32 %v1239, %v1241
        %1322 = vmax.xlane.f32.xlu0 %v1321
        %v1323 = vpop.xlane.xlu0 %1322
        %v1324 = vmax.f32 %v1245, %v1247
        %1325 = vmax.xlane.f32.xlu0 %v1324
        %v1326 = vpop.xlane.xlu0 %1325
        %v1327 = vmax.f32 %v1251, %v1253
        %1328 = vmax.xlane.f32.xlu0 %v1327
        %v1329 = vpop.xlane.xlu0 %1328
        %v1330 = vmax.f32 %v1257, %v1259
        %1331 = vmax.xlane.f32.xlu0 %v1330
        %v1332 = vpop.xlane.xlu0 %1331
        %v1333 = vmax.f32 %v1263, %v1265
        %1334 = vmax.xlane.f32.xlu0 %v1333
        %v1335 = vpop.xlane.xlu0 %1334
        %v1336 = vmax.f32 %v1269, %v1271
        %1337 = vmax.xlane.f32.xlu0 %v1336
        %v1338 = vpop.xlane.xlu0 %1337
        %v1339 = vmax.f32 %v1275, %v1277
        %1340 = vmax.xlane.f32.xlu0 %v1339
        %v1341 = vpop.xlane.xlu0 %1340
        %v1342 = vmax.f32 %v1281, %v1283
        %1343 = vmax.xlane.f32.xlu0 %v1342
        %v1344 = vpop.xlane.xlu0 %1343
        %v1345 = vmax.f32 %v1287, %v1289
        %1346 = vmax.xlane.f32.xlu0 %v1345
        %v1347 = vpop.xlane.xlu0 %1346
        %v1348 = vmax.f32 %v1293, %v1295
        %1349 = vmax.xlane.f32.xlu0 %v1348
        %v1350 = vpop.xlane.xlu0 %1349
        %v1351 = vmax.f32 %v1299, %v1301
        %1352 = vmax.xlane.f32.xlu0 %v1351
        %v1353 = vpop.xlane.xlu0 %1352
        %v1354 = vmax.f32 %v1305, %v1307
        %1355 = vmax.xlane.f32.xlu0 %v1354
        %v1356 = vpop.xlane.xlu0 %1355
        %v1357 = vsub.f32 %v1215, %v1311
        %v1358 = vsub.f32 %v1217, %v1311
        %v1359 = vsub.f32 %v1221, %v1314
        %v1360 = vsub.f32 %v1223, %v1314
        %v1361 = vsub.f32 %v1227, %v1317
        %v1362 = vsub.f32 %v1229, %v1317
        %v1363 = vsub.f32 %v1233, %v1320
        %v1364 = vsub.f32 %v1235, %v1320
        %v1365 = vsub.f32 %v1239, %v1323
        %v1366 = vsub.f32 %v1241, %v1323
        %v1367 = vsub.f32 %v1245, %v1326
        %v1368 = vsub.f32 %v1247, %v1326
        %v1369 = vsub.f32 %v1251, %v1329
        %v1370 = vsub.f32 %v1253, %v1329
        %v1371 = vsub.f32 %v1257, %v1332
        %v1372 = vsub.f32 %v1259, %v1332
        %v1373 = vsub.f32 %v1263, %v1335
        %v1374 = vsub.f32 %v1265, %v1335
        %v1375 = vsub.f32 %v1269, %v1338
        %v1376 = vsub.f32 %v1271, %v1338
        %v1377 = vsub.f32 %v1275, %v1341
        %v1378 = vsub.f32 %v1277, %v1341
        %v1379 = vsub.f32 %v1281, %v1344
        %v1380 = vsub.f32 %v1283, %v1344
        %v1381 = vsub.f32 %v1287, %v1347
        %v1382 = vsub.f32 %v1289, %v1347
        %v1383 = vsub.f32 %v1293, %v1350
        %v1384 = vsub.f32 %v1295, %v1350
        %v1385 = vsub.f32 %v1299, %v1353
        %v1386 = vsub.f32 %v1301, %v1353
        %v1387 = vsub.f32 %v1305, %v1356
        %v1388 = vsub.f32 %v1307, %v1356
        %v1389 = vmul.f32 %v1357, 1.442695
        %v1390 = vpow.pop %v1389
        %v1391 = vmul.f32 %v1358, 1.442695
        %v1392 = vpow.pop %v1391
        %v1393 = vmul.f32 %v1359, 1.442695
        %v1394 = vpow.pop %v1393
        %v1395 = vmul.f32 %v1360, 1.442695
        %v1396 = vpow.pop %v1395
        %v1397 = vmul.f32 %v1361, 1.442695
        %v1398 = vpow.pop %v1397
        %v1399 = vmul.f32 %v1362, 1.442695
        %v1400 = vpow.pop %v1399
        %v1401 = vmul.f32 %v1363, 1.442695
        %v1402 = vpow.pop %v1401
        %v1403 = vmul.f32 %v1364, 1.442695
        %v1404 = vpow.pop %v1403
        %v1405 = vmul.f32 %v1365, 1.442695
        %v1406 = vpow.pop %v1405
        %v1407 = vmul.f32 %v1366, 1.442695
        %v1408 = vpow.pop %v1407
        %v1409 = vmul.f32 %v1367, 1.442695
        %v1410 = vpow.pop %v1409
        %v1411 = vmul.f32 %v1368, 1.442695
        %v1412 = vpow.pop %v1411
        %v1413 = vmul.f32 %v1369, 1.442695
        %v1414 = vpow.pop %v1413
        %v1415 = vmul.f32 %v1370, 1.442695
        %v1416 = vpow.pop %v1415
        %v1417 = vmul.f32 %v1371, 1.442695
        %v1418 = vpow.pop %v1417
        %v1419 = vmul.f32 %v1372, 1.442695
        %v1420 = vpow.pop %v1419
        %v1421 = vmul.f32 %v1373, 1.442695
        %v1422 = vpow.pop %v1421
        %v1423 = vmul.f32 %v1374, 1.442695
        %v1424 = vpow.pop %v1423
        %v1425 = vmul.f32 %v1375, 1.442695
        %v1426 = vpow.pop %v1425
        %v1427 = vmul.f32 %v1376, 1.442695
        %v1428 = vpow.pop %v1427
        %v1429 = vmul.f32 %v1377, 1.442695
        %v1430 = vpow.pop %v1429
        %v1431 = vmul.f32 %v1378, 1.442695
        %v1432 = vpow.pop %v1431
        %v1433 = vmul.f32 %v1379, 1.442695
        %v1434 = vpow.pop %v1433
        %v1435 = vmul.f32 %v1380, 1.442695
        %v1436 = vpow.pop %v1435
        %v1437 = vmul.f32 %v1381, 1.442695
        %v1438 = vpow.pop %v1437
        %v1439 = vmul.f32 %v1382, 1.442695
        %v1440 = vpow.pop %v1439
        %v1441 = vmul.f32 %v1383, 1.442695
        %v1442 = vpow.pop %v1441
        %v1443 = vmul.f32 %v1384, 1.442695
        %v1444 = vpow.pop %v1443
        %v1445 = vmul.f32 %v1385, 1.442695
        %v1446 = vpow.pop %v1445
        %v1447 = vmul.f32 %v1386, 1.442695
        %v1448 = vpow.pop %v1447
        %v1449 = vmul.f32 %v1387, 1.442695
        %v1450 = vpow.pop %v1449
        %v1451 = vmul.f32 %v1388, 1.442695
        %v1452 = vpow.pop %v1451
        %v1453 = vadd.f32 %v1390, %v1392
        %1454 = vadd.xlane.f32.xlu0 %v1453
        %v1455 = vpop.xlane.xlu0 %1454
        %v1456 = vadd.f32 %v1394, %v1396
        %1457 = vadd.xlane.f32.xlu0 %v1456
        %v1458 = vpop.xlane.xlu0 %1457
        %v1459 = vadd.f32 %v1398, %v1400
        %1460 = vadd.xlane.f32.xlu0 %v1459
        %v1461 = vpop.xlane.xlu0 %1460
        %v1462 = vadd.f32 %v1402, %v1404
        %1463 = vadd.xlane.f32.xlu0 %v1462
        %v1464 = vpop.xlane.xlu0 %1463
        %v1465 = vadd.f32 %v1406, %v1408
        %1466 = vadd.xlane.f32.xlu0 %v1465
        %v1467 = vpop.xlane.xlu0 %1466
        %v1468 = vadd.f32 %v1410, %v1412
        %1469 = vadd.xlane.f32.xlu0 %v1468
        %v1470 = vpop.xlane.xlu0 %1469
        %v1471 = vadd.f32 %v1414, %v1416
        %1472 = vadd.xlane.f32.xlu0 %v1471
        %v1473 = vpop.xlane.xlu0 %1472
        %v1474 = vadd.f32 %v1418, %v1420
        %1475 = vadd.xlane.f32.xlu0 %v1474
        %v1476 = vpop.xlane.xlu0 %1475
        %v1477 = vadd.f32 %v1422, %v1424
        %1478 = vadd.xlane.f32.xlu0 %v1477
        %v1479 = vpop.xlane.xlu0 %1478
        %v1480 = vadd.f32 %v1426, %v1428
        %1481 = vadd.xlane.f32.xlu0 %v1480
        %v1482 = vpop.xlane.xlu0 %1481
        %v1483 = vadd.f32 %v1430, %v1432
        %1484 = vadd.xlane.f32.xlu0 %v1483
        %v1485 = vpop.xlane.xlu0 %1484
        %v1486 = vadd.f32 %v1434, %v1436
        %1487 = vadd.xlane.f32.xlu0 %v1486
        %v1488 = vpop.xlane.xlu0 %1487
        %v1489 = vadd.f32 %v1438, %v1440
        %1490 = vadd.xlane.f32.xlu0 %v1489
        %v1491 = vpop.xlane.xlu0 %1490
        %v1492 = vadd.f32 %v1442, %v1444
        %1493 = vadd.xlane.f32.xlu0 %v1492
        %v1494 = vpop.xlane.xlu0 %1493
        %v1495 = vadd.f32 %v1446, %v1448
        %1496 = vadd.xlane.f32.xlu0 %v1495
        %v1497 = vpop.xlane.xlu0 %1496
        %v1498 = vadd.f32 %v1450, %v1452
        %1499 = vadd.xlane.f32.xlu0 %v1498
        %v1500 = vpop.xlane.xlu0 %1499
        %v1501 = vrcp.pop %v1455
        %v1502 = vrcp.pop %v1458
        %v1503 = vrcp.pop %v1461
        %v1504 = vrcp.pop %v1464
        %v1505 = vrcp.pop %v1467
        %v1506 = vrcp.pop %v1470
        %v1507 = vrcp.pop %v1473
        %v1508 = vrcp.pop %v1476
        %v1509 = vrcp.pop %v1479
        %v1510 = vrcp.pop %v1482
        %v1511 = vrcp.pop %v1485
        %v1512 = vrcp.pop %v1488
        %v1513 = vrcp.pop %v1491
        %v1514 = vrcp.pop %v1494
        %v1515 = vrcp.pop %v1497
        %v1516 = vrcp.pop %v1500
        %v1517 = vmul.f32 %v1390, %v1501
        %v1518 = vmul.f32 %v1392, %v1501
        %v1519 = vmul.f32 %v1394, %v1502
        %v1520 = vmul.f32 %v1396, %v1502
        %v1521 = vmul.f32 %v1398, %v1503
        %v1522 = vmul.f32 %v1400, %v1503
        %v1523 = vmul.f32 %v1402, %v1504
        %v1524 = vmul.f32 %v1404, %v1504
        %v1525 = vmul.f32 %v1406, %v1505
        %v1526 = vmul.f32 %v1408, %v1505
        %v1527 = vmul.f32 %v1410, %v1506
        %v1528 = vmul.f32 %v1412, %v1506
        %v1529 = vmul.f32 %v1414, %v1507
        %v1530 = vmul.f32 %v1416, %v1507
        %v1531 = vmul.f32 %v1418, %v1508
        %v1532 = vmul.f32 %v1420, %v1508
        %v1533 = vmul.f32 %v1422, %v1509
        %v1534 = vmul.f32 %v1424, %v1509
        %v1535 = vmul.f32 %v1426, %v1510
        %v1536 = vmul.f32 %v1428, %v1510
        %v1537 = vmul.f32 %v1430, %v1511
        %v1538 = vmul.f32 %v1432, %v1511
        %v1539 = vmul.f32 %v1434, %v1512
        %v1540 = vmul.f32 %v1436, %v1512
        %v1541 = vmul.f32 %v1438, %v1513
        %v1542 = vmul.f32 %v1440, %v1513
        %v1543 = vmul.f32 %v1442, %v1514
        %v1544 = vmul.f32 %v1444, %v1514
        %v1545 = vmul.f32 %v1446, %v1515
        %v1546 = vmul.f32 %v1448, %v1515
        %v1547 = vmul.f32 %v1450, %v1516
        %v1548 = vmul.f32 %v1452, %v1516
        %1549 = vst [vmem:[%s246] sm:$0xff] %v1517
        %1550 = vst [vmem:[%s246 + $0x8] sm:$0xff] %v1518
        %1551 = vst [vmem:[%s246 + $0x10] sm:$0xff] %v1519
        %1552 = vst [vmem:[%s246 + $0x18] sm:$0xff] %v1520
        %1553 = vst [vmem:[%s246 + $0x20] sm:$0xff] %v1521
        %1554 = vst [vmem:[%s246 + $0x28] sm:$0xff] %v1522
        %1555 = vst [vmem:[%s246 + $0x30] sm:$0xff] %v1523
        %1556 = vst [vmem:[%s246 + $0x38] sm:$0xff] %v1524
        %1557 = vst [vmem:[%s246 + $0x40] sm:$0xff] %v1525
        %1558 = vst [vmem:[%s246 + $0x48] sm:$0xff] %v1526
        %1559 = vst [vmem:[%s246 + $0x50] sm:$0xff] %v1527
        %1560 = vst [vmem:[%s246 + $0x58] sm:$0xff] %v1528
        %1561 = vst [vmem:[%s246 + $0x60] sm:$0xff] %v1529
        %1562 = vst [vmem:[%s246 + $0x68] sm:$0xff] %v1530
        %1563 = vst [vmem:[%s246 + $0x70] sm:$0xff] %v1531
        %1564 = vst [vmem:[%s246 + $0x78] sm:$0xff] %v1532
        %1565 = vst [vmem:[%s246 + $0x80] sm:$0xff] %v1533
        %1566 = vst [vmem:[%s246 + $0x88] sm:$0xff] %v1534
        %1567 = vst [vmem:[%s246 + $0x90] sm:$0xff] %v1535
        %1568 = vst [vmem:[%s246 + $0x98] sm:$0xff] %v1536
        %1569 = vst [vmem:[%s246 + $0xa0] sm:$0xff] %v1537
        %1570 = vst [vmem:[%s246 + $0xa8] sm:$0xff] %v1538
        %1571 = vst [vmem:[%s246 + $0xb0] sm:$0xff] %v1539
        %1572 = vst [vmem:[%s246 + $0xb8] sm:$0xff] %v1540
        %1573 = vst [vmem:[%s246 + $0xc0] sm:$0xff] %v1541
        %1574 = vst [vmem:[%s246 + $0xc8] sm:$0xff] %v1542
        %1575 = vst [vmem:[%s246 + $0xd0] sm:$0xff] %v1543
        %1576 = vst [vmem:[%s246 + $0xd8] sm:$0xff] %v1544
        %1577 = vst [vmem:[%s246 + $0xe0] sm:$0xff] %v1545
        %1578 = vst [vmem:[%s246 + $0xe8] sm:$0xff] %v1546
        %1579 = vst [vmem:[%s246 + $0xf0] sm:$0xff] %v1547
        %1580 = vst [vmem:[%s246 + $0xf8] sm:$0xff] %v1548
        %v1581 = vld [vmem:[#allocation4] sm:$0xff]
        %v1582 = vld [vmem:[#allocation4 + $0x8] sm:$0xff]
        %v1583 = vld [vmem:[#allocation4 + $0x10] sm:$0xff]
        %v1584 = vld [vmem:[#allocation4 + $0x18] sm:$0xff]
        %v1585 = vld [vmem:[#allocation4 + $0x20] sm:$0xff]
        %v1586 = vld [vmem:[#allocation4 + $0x28] sm:$0xff]
        %v1587 = vld [vmem:[#allocation4 + $0x30] sm:$0xff]
        %v1588 = vld [vmem:[#allocation4 + $0x38] sm:$0xff]
        %v1589 = vld [vmem:[#allocation4 + $0x40] sm:$0xff]
        %v1590 = vld [vmem:[#allocation4 + $0x48] sm:$0xff]
        %v1591 = vld [vmem:[#allocation4 + $0x50] sm:$0xff]
        %v1592 = vld [vmem:[#allocation4 + $0x58] sm:$0xff]
        %v1593 = vld [vmem:[#allocation4 + $0x60] sm:$0xff]
        %v1594 = vld [vmem:[#allocation4 + $0x68] sm:$0xff]
        %v1595 = vld [vmem:[#allocation4 + $0x70] sm:$0xff]
        %v1596 = vld [vmem:[#allocation4 + $0x78] sm:$0xff]
        %v1597 = vld [vmem:[#allocation4 + $0x80] sm:$0xff]
        %v1598 = vld [vmem:[#allocation4 + $0x88] sm:$0xff]
        %v1599 = vld [vmem:[#allocation4 + $0x90] sm:$0xff]
        %v1600 = vld [vmem:[#allocation4 + $0x98] sm:$0xff]
        %v1601 = vld [vmem:[#allocation4 + $0xa0] sm:$0xff]
        %v1602 = vld [vmem:[#allocation4 + $0xa8] sm:$0xff]
        %v1603 = vld [vmem:[#allocation4 + $0xb0] sm:$0xff]
        %v1604 = vld [vmem:[#allocation4 + $0xb8] sm:$0xff]
        %v1605 = vld [vmem:[#allocation4 + $0xc0] sm:$0xff]
        %v1606 = vld [vmem:[#allocation4 + $0xc8] sm:$0xff]
        %v1607 = vld [vmem:[#allocation4 + $0xd0] sm:$0xff]
        %v1608 = vld [vmem:[#allocation4 + $0xd8] sm:$0xff]
        %v1609 = vld [vmem:[#allocation4 + $0xe0] sm:$0xff]
        %v1610 = vld [vmem:[#allocation4 + $0xe8] sm:$0xff]
        %v1611 = vld [vmem:[#allocation4 + $0xf0] sm:$0xff]
        %v1612 = vld [vmem:[#allocation4 + $0xf8] sm:$0xff]
        %1613 = vmatprep.subr.mxu0 0.0
        %1614 = vmatpush1.msra.mxu0 %v1581
        %1615 = vmatprep.subr.mxu0 0.0
        %1616 = vmatpush1.msra.mxu0 %v1582
        %1617 = vmatprep.subr.mxu0 0.0
        %1618 = vmatpush1.msra.mxu0 %v1583
        %1619 = vmatprep.subr.mxu0 0.0
        %1620 = vmatpush1.msra.mxu0 %v1584
        %1621 = vmatprep.subr.mxu0 0.0
        %1622 = vmatpush1.msra.mxu0 %v1585
        %1623 = vmatprep.subr.mxu0 0.0
        %1624 = vmatpush1.msra.mxu0 %v1586
        %1625 = vmatprep.subr.mxu0 0.0
        %1626 = vmatpush1.msra.mxu0 %v1587
        %1627 = vmatprep.subr.mxu0 0.0
        %1628 = vmatpush1.msra.mxu0 %v1588
        %1629 = vmatprep.subr.mxu0 0.0
        %1630 = vmatpush1.msra.mxu0 %v1589
        %1631 = vmatprep.subr.mxu0 0.0
        %1632 = vmatpush1.msra.mxu0 %v1590
        %1633 = vmatprep.subr.mxu0 0.0
        %1634 = vmatpush1.msra.mxu0 %v1591
        %1635 = vmatprep.subr.mxu0 0.0
        %1636 = vmatpush1.msra.mxu0 %v1592
        %1637 = vmatprep.subr.mxu0 0.0
        %1638 = vmatpush1.msra.mxu0 %v1593
        %1639 = vmatprep.subr.mxu0 0.0
        %1640 = vmatpush1.msra.mxu0 %v1594
        %1641 = vmatprep.subr.mxu0 0.0
        %1642 = vmatpush1.msra.mxu0 %v1595
        %1643 = vmatprep.subr.mxu0 0.0
        %1644 = vmatpush1.msra.mxu0 %v1596
        %1645 = vmatprep.subr.mxu0 0.0
        %1646 = vmatpush1.msra.mxu0 %v1597
        %1647 = vmatprep.subr.mxu0 0.0
        %1648 = vmatpush1.msra.mxu0 %v1598
        %1649 = vmatprep.subr.mxu0 0.0
        %1650 = vmatpush1.msra.mxu0 %v1599
        %1651 = vmatprep.subr.mxu0 0.0
        %1652 = vmatpush1.msra.mxu0 %v1600
        %1653 = vmatprep.subr.mxu0 0.0
        %1654 = vmatpush1.msra.mxu0 %v1601
        %1655 = vmatprep.subr.mxu0 0.0
        %1656 = vmatpush1.msra.mxu0 %v1602
        %1657 = vmatprep.subr.mxu0 0.0
        %1658 = vmatpush1.msra.mxu0 %v1603
        %1659 = vmatprep.subr.mxu0 0.0
        %1660 = vmatpush1.msra.mxu0 %v1604
        %1661 = vmatprep.subr.mxu0 0.0
        %1662 = vmatpush1.msra.mxu0 %v1605
        %1663 = vmatprep.subr.mxu0 0.0
        %1664 = vmatpush1.msra.mxu0 %v1606
        %1665 = vmatprep.subr.mxu0 0.0
        %1666 = vmatpush1.msra.mxu0 %v1607
        %1667 = vmatprep.subr.mxu0 0.0
        %1668 = vmatpush1.msra.mxu0 %v1608
        %1669 = vmatprep.subr.mxu0 0.0
        %1670 = vmatpush1.msra.mxu0 %v1609
        %1671 = vmatprep.subr.mxu0 0.0
        %1672 = vmatpush1.msra.mxu0 %v1610
        %1673 = vmatprep.subr.mxu0 0.0
        %1674 = vmatpush1.msra.mxu0 %v1611
        %1675 = vmatprep.subr.mxu0 0.0
        %1676 = vmatpush1.msra.mxu0 %v1612
        %1677 = vmatprep.mubr.f32.mxu0 %v1518
        %1678 = vmatmul.mubr.f32.gmra.mrb[0].mxu0 %v1517
        %v1679 = vpop.f32.mrb[0].mxu0
        %v1680 = vadd.f32 0.0, %v1679
        %v1681 = vpop.f32.mrb[0].mxu0
        %1682 = vmatprep.mubr.f32.mxu0 %v1520
        %1683 = vmatmul.mubr.f32.gmra.mrb[0].mxu0 %v1519
        %v1684 = vpop.f32.mrb[0].mxu0
        %v1685 = vadd.f32 0.0, %v1684
        %v1686 = vpop.f32.mrb[0].mxu0
        %1687 = vmatprep.mubr.f32.mxu0 %v1522
        %1688 = vmatmul.mubr.f32.gmra.mrb[0].mxu0 %v1521
        %v1689 = vpop.f32.mrb[0].mxu0
        %v1690 = vadd.f32 0.0, %v1689
        %v1691 = vpop.f32.mrb[0].mxu0
        %1692 = vmatprep.mubr.f32.mxu0 %v1524
        %1693 = vmatmul.mubr.f32.gmra.mrb[0].mxu0 %v1523
        %v1694 = vpop.f32.mrb[0].mxu0
        %v1695 = vadd.f32 0.0, %v1694
        %v1696 = vpop.f32.mrb[0].mxu0
        %1697 = vmatprep.mubr.f32.mxu0 %v1526
        %1698 = vmatmul.mubr.f32.gmra.mrb[0].mxu0 %v1525
        %v1699 = vpop.f32.mrb[0].mxu0
        %v1700 = vadd.f32 0.0, %v1699
        %v1701 = vpop.f32.mrb[0].mxu0
        %1702 = vmatprep.mubr.f32.mxu0 %v1528
        %1703 = vmatmul.mubr.f32.gmra.mrb[0].mxu0 %v1527
        %v1704 = vpop.f32.mrb[0].mxu0
        %v1705 = vadd.f32 0.0, %v1704
        %v1706 = vpop.f32.mrb[0].mxu0
        %1707 = vmatprep.mubr.f32.mxu0 %v1530
        %1708 = vmatmul.mubr.f32.gmra.mrb[0].mxu0 %v1529
        %v1709 = vpop.f32.mrb[0].mxu0
        %v1710 = vadd.f32 0.0, %v1709
        %v1711 = vpop.f32.mrb[0].mxu0
        %1712 = vmatprep.mubr.f32.mxu0 %v1532
        %1713 = vmatmul.mubr.f32.gmra.mrb[0].mxu0 %v1531
        %v1714 = vpop.f32.mrb[0].mxu0
        %v1715 = vadd.f32 0.0, %v1714
        %v1716 = vpop.f32.mrb[0].mxu0
        %1717 = vmatprep.mubr.f32.mxu0 %v1534
        %1718 = vmatmul.mubr.f32.gmra.mrb[0].mxu0 %v1533
        %v1719 = vpop.f32.mrb[0].mxu0
        %v1720 = vadd.f32 0.0, %v1719
        %v1721 = vpop.f32.mrb[0].mxu0
        %1722 = vmatprep.mubr.f32.mxu0 %v1536
        %1723 = vmatmul.mubr.f32.gmra.mrb[0].mxu0 %v1535
        %v1724 = vpop.f32.mrb[0].mxu0
        %v1725 = vadd.f32 0.0, %v1724
        %v1726 = vpop.f32.mrb[0].mxu0
        %1727 = vmatprep.mubr.f32.mxu0 %v1538
        %1728 = vmatmul.mubr.f32.gmra.mrb[0].mxu0 %v1537
        %v1729 = vpop.f32.mrb[0].mxu0
        %v1730 = vadd.f32 0.0, %v1729
        %v1731 = vpop.f32.mrb[0].mxu0
        %1732 = vmatprep.mubr.f32.mxu0 %v1540
        %1733 = vmatmul.mubr.f32.gmra.mrb[0].mxu0 %v1539
        %v1734 = vpop.f32.mrb[0].mxu0
        %v1735 = vadd.f32 0.0, %v1734
        %v1736 = vpop.f32.mrb[0].mxu0
        %1737 = vmatprep.mubr.f32.mxu0 %v1542
        %1738 = vmatmul.mubr.f32.gmra.mrb[0].mxu0 %v1541
        %v1739 = vpop.f32.mrb[0].mxu0
        %v1740 = vadd.f32 0.0, %v1739
        %v1741 = vpop.f32.mrb[0].mxu0
        %1742 = vmatprep.mubr.f32.mxu0 %v1544
        %1743 = vmatmul.mubr.f32.gmra.mrb[0].mxu0 %v1543
        %v1744 = vpop.f32.mrb[0].mxu0
        %v1745 = vadd.f32 0.0, %v1744
        %v1746 = vpop.f32.mrb[0].mxu0
        %1747 = vmatprep.mubr.f32.mxu0 %v1546
        %1748 = vmatmul.mubr.f32.gmra.mrb[0].mxu0 %v1545
        %v1749 = vpop.f32.mrb[0].mxu0
        %v1750 = vadd.f32 0.0, %v1749
        %v1751 = vpop.f32.mrb[0].mxu0
        %1752 = vmatprep.mubr.f32.mxu0 %v1548
        %1753 = vmatmul.mubr.f32.gmra.mrb[0].mxu0 %v1547
        %v1754 = vpop.f32.mrb[0].mxu0
        %v1755 = vadd.f32 0.0, %v1754
        %v1756 = vpop.f32.mrb[0].mxu0
        %1757 = vdwg.mxu0
        %s1758 = scalar_lea.vmem %s251, %s953
        %v1759 = vld [vmem:[%s1758] sm:$0xff]
        %v1760 = vld [vmem:[%s1758 + $0x8] sm:$0xff]
        %v1761 = vld [vmem:[%s1758 + $0x10] sm:$0xff]
        %v1762 = vld [vmem:[%s1758 + $0x18] sm:$0xff]
        %v1763 = vld [vmem:[%s1758 + $0x20] sm:$0xff]
        %v1764 = vld [vmem:[%s1758 + $0x28] sm:$0xff]
        %v1765 = vld [vmem:[%s1758 + $0x30] sm:$0xff]
        %v1766 = vld [vmem:[%s1758 + $0x38] sm:$0xff]
        %v1767 = vld [vmem:[%s1758 + $0x40] sm:$0xff]
        %v1768 = vld [vmem:[%s1758 + $0x48] sm:$0xff]
        %v1769 = vld [vmem:[%s1758 + $0x50] sm:$0xff]
        %v1770 = vld [vmem:[%s1758 + $0x58] sm:$0xff]
        %v1771 = vld [vmem:[%s1758 + $0x60] sm:$0xff]
        %v1772 = vld [vmem:[%s1758 + $0x68] sm:$0xff]
        %v1773 = vld [vmem:[%s1758 + $0x70] sm:$0xff]
        %v1774 = vld [vmem:[%s1758 + $0x78] sm:$0xff]
        %s1775 = sld [smem:[#allocation5]]
        %v1776 = vstv %s1775
        %v1777 = vmul.f32 %v1776, %v1680
        %v1778 = vmul.f32 %v1776, %v1685
        %v1779 = vmul.f32 %v1776, %v1690
        %v1780 = vmul.f32 %v1776, %v1695
        %v1781 = vmul.f32 %v1776, %v1700
        %v1782 = vmul.f32 %v1776, %v1705
        %v1783 = vmul.f32 %v1776, %v1710
        %v1784 = vmul.f32 %v1776, %v1715
        %v1785 = vmul.f32 %v1776, %v1720
        %v1786 = vmul.f32 %v1776, %v1725
        %v1787 = vmul.f32 %v1776, %v1730
        %v1788 = vmul.f32 %v1776, %v1735
        %v1789 = vmul.f32 %v1776, %v1740
        %v1790 = vmul.f32 %v1776, %v1745
        %v1791 = vmul.f32 %v1776, %v1750
        %v1792 = vmul.f32 %v1776, %v1755
        %v1793 = vadd.f32 %v1777, %v1759
        %v1794 = vadd.f32 %v1778, %v1760
        %v1795 = vadd.f32 %v1779, %v1761
        %v1796 = vadd.f32 %v1780, %v1762
        %v1797 = vadd.f32 %v1781, %v1763
        %v1798 = vadd.f32 %v1782, %v1764
        %v1799 = vadd.f32 %v1783, %v1765
        %v1800 = vadd.f32 %v1784, %v1766
        %v1801 = vadd.f32 %v1785, %v1767
        %v1802 = vadd.f32 %v1786, %v1768
        %v1803 = vadd.f32 %v1787, %v1769
        %v1804 = vadd.f32 %v1788, %v1770
        %v1805 = vadd.f32 %v1789, %v1771
        %v1806 = vadd.f32 %v1790, %v1772
        %v1807 = vadd.f32 %v1791, %v1773
        %v1808 = vadd.f32 %v1792, %v1774
        %vm1809 = vcmask 261120
        %1810 = vst.msk [vmem:[%s260] sm:$0xff] %vm1809, %v1793
        %1811 = vst.msk [vmem:[%s260 + $0x8] sm:$0xff] %vm1809, %v1794
        %1812 = vst.msk [vmem:[%s260 + $0x10] sm:$0xff] %vm1809, %v1795
        %1813 = vst.msk [vmem:[%s260 + $0x18] sm:$0xff] %vm1809, %v1796
        %1814 = vst.msk [vmem:[%s260 + $0x20] sm:$0xff] %vm1809, %v1797
        %1815 = vst.msk [vmem:[%s260 + $0x28] sm:$0xff] %vm1809, %v1798
        %1816 = vst.msk [vmem:[%s260 + $0x30] sm:$0xff] %vm1809, %v1799
        %1817 = vst.msk [vmem:[%s260 + $0x38] sm:$0xff] %vm1809, %v1800
        %1818 = vst.msk [vmem:[%s260 + $0x40] sm:$0xff] %vm1809, %v1801
        %1819 = vst.msk [vmem:[%s260 + $0x48] sm:$0xff] %vm1809, %v1802
        %1820 = vst.msk [vmem:[%s260 + $0x50] sm:$0xff] %vm1809, %v1803
        %1821 = vst.msk [vmem:[%s260 + $0x58] sm:$0xff] %vm1809, %v1804
        %1822 = vst.msk [vmem:[%s260 + $0x60] sm:$0xff] %vm1809, %v1805
        %1823 = vst.msk [vmem:[%s260 + $0x68] sm:$0xff] %vm1809, %v1806
        %1824 = vst.msk [vmem:[%s260 + $0x70] sm:$0xff] %vm1809, %v1807
        %1825 = vst.msk [vmem:[%s260 + $0x78] sm:$0xff] %vm1809, %v1808
        %s1826 = smul.u32 16, %s26
        %p1827 = scmp.lt.s32.totalorder %s25, 1
        %s1828 = scalar_select %p1827, %s25, 1
        %p1829 = scmp.lt.s32.totalorder %s1826, 31
        %s1830 = scalar_select %p1829, %s1826, 31
        %s1831 = smul.addr %s1828, 32
        %s1832 = sadd.s32 %s1830, %s1831
        %s1833 = smul.addr %s1832, 8
        %s1834 = scalar_lea.vmem %s4, %s1833
        %s1835 = sand.u32 %s160, 1
        %s1836 = scalar_lea.sflag [#allocation7], %s1835
        %s1837 = sand.u32 %s160, 1
        %s1838 = smul.addr %s1837, 256
        %s1839 = scalar_lea.vmem [#allocation6], %s1838
        // Predicated region
        $region41: #{tpu_custom_call.1} parent=35 // pred_check
          %p1840 = pneg %p142
        $region42: #{tpu_custom_call.1} parent=35 // pred_check_branch
          %1842 = sbr.rel (%p1840) target = $region44
        $region43: #{tpu_custom_call.1} parent=35 // pred_region
          %s1843 = smul.u32 16, %s26
        $region44: #{tpu_custom_call.1} parent=35 // pred_fallthru
          _
        // Predicated region
        $region45: #{tpu_custom_call.1} parent=35 // pred_check
          %p1844 = pneg %p170
        $region46: #{tpu_custom_call.1} parent=35 // pred_check_branch
          %1846 = sbr.rel (%p1844) target = $region48
        $region47: #{tpu_custom_call.1} parent=35 // pred_region
          %s1847 = smul.u32 16, %s26
          %s1849 = ssub.s32 4096, 4096
          %1850 = vsyncadd %s1836, %s1849
          %s1851 = smul.addr %s1847, 2
          %s1852 = smul.addr %s25, 64
          %s1853 = sadd.s32 %s1851, %s1852
          %s1854 = smul.addr %s1853, 128
          %s1855 = scalar_lea.hbm %s5, %s1854
          %s1856 = sshll.u32 %s1839, 4
          %s1857 = int_to_ptr.vmem [resolvable:$true] %s1856
          %1862 = dma.vmem_to_hbm [thread:$0]  %s1857, 4096, %s1855, %s1836, 256, 256, 16
        $region48: #{tpu_custom_call.1} parent=35 // pred_fallthru
          _
      $region36: #{tpu_custom_call.1} parent=5 // pred_fallthru
        _
      %p1863 = scmp.le.s32.totalorder 2, %s16
      // Predicated region
      $region49: #{tpu_custom_call.1} parent=5 // pred_check
        %p1864 = pneg %p1863
      $region50: #{tpu_custom_call.1} parent=5 // pred_check_branch
        %1866 = sbr.rel (%p1864) target = $region52
      $region51: #{tpu_custom_call.1} parent=5 // pred_region
        %s1867 = ssub.s32 %s16, 2
        // Predicated region
        $region53: #{tpu_custom_call.1} parent=51 // pred_check
          %p1868 = pneg %p148
        $region54: #{tpu_custom_call.1} parent=51 // pred_check_branch
          %1870 = sbr.rel (%p1868) target = $region56
        $region55: #{tpu_custom_call.1} parent=51 // pred_region
          %s1871 = smul.u32 16, %s28
          %p1872 = scmp.lt.s32.totalorder %s27, 1
          %s1873 = scalar_select %p1872, %s27, 1
          %p1874 = scmp.lt.s32.totalorder %s1871, 31
          %s1875 = scalar_select %p1874, %s1871, 31
          %s1876 = smul.addr %s1873, 32
          %s1877 = sadd.s32 %s1875, %s1876
          %s1878 = smul.addr %s1877, 8
          %s1879 = scalar_lea.vmem %s4, %s1878
        $region56: #{tpu_custom_call.1} parent=51 // pred_fallthru
          _
        // Predicated region
        $region57: #{tpu_custom_call.1} parent=51 // pred_check
          %p1880 = pneg %p176
        $region58: #{tpu_custom_call.1} parent=51 // pred_check_branch
          %1882 = sbr.rel (%p1880) target = $region60
        $region59: #{tpu_custom_call.1} parent=51 // pred_region
          %s1883 = sand.u32 %s161, 1
          %s1884 = scalar_lea.sflag [#allocation7], %s1883
          %s1885 = sand.u32 %s161, 1
          %s1886 = smul.addr %s1885, 256
          %s1887 = scalar_lea.vmem [#allocation6], %s1886
          %1888 = dma.done %s1884, 4096
        $region60: #{tpu_custom_call.1} parent=51 // pred_fallthru
          _
      $region52: #{tpu_custom_call.1} parent=5 // pred_fallthru
        _
    $region6: #{tpu_custom_call.1} parent=1 // loop_footer
      %s20 = sadd.s32 1, %s16
    $region7: #{tpu_custom_call.1} parent=1 // loop_footer_branch
      %15 = sbr.rel target = $region3
    $region8: #{tpu_custom_call.1} parent=1 // loop_exit
      _
    %1889 = vsyncpa [#allocation7], 1
    %s1890 = scalar_lea.sflag [#allocation7], 1
    %1891 = vsyncpa %s1890, 1

</llo_original>
